<compile_context>
chip_gen: v7x
topology: tpu7x:2x2x1
jax: 0.10.0
libtpu: 0.0.40
codegen_flags: <defaults>
</compile_context>

<pallas_src>
import jax
import jax.numpy as jnp
from jax import lax
from jax.experimental import pallas as pl
from jax.experimental.pallas import tpu as pltpu


# ---------------------------------------------------------------------------
# Config (mirrors the PyTorch `config` object's fields used by LSTMNet).
# ---------------------------------------------------------------------------
class Config:
    n_vocab = 50        # vocab size (last index is padding_idx)
    embed = 32          # embedding dim
    hidden_dim = 32     # LSTM hidden dim
    layer_dim = 2       # number of stacked LSTM layers
    num_classes = 4     # output classes


# ---------------------------------------------------------------------------
# Fused Pallas kernel
# ---------------------------------------------------------------------------
def _make_lstm_net_kernel(num_layers, Bp, T, H):
    """Fused kernel: one-hot embedding/proj matmul + wavefront LSTM layers + FC."""
    n_extra = 2 * (num_layers - 1)
    G = 4 * H

    def kernel(*refs):
        ids_ref = refs[0]                       # (T*Bp, 1) int32, row t*Bp+b = token (b, t)
        gtbl_ref = refs[1]                      # (V_pad, 4H) f32: emb @ W_ih0^T + b0, g cols x2
        whh0_ref = refs[2]                      # (H, 4H) bf16, g cols x2
        layer_refs = refs[3:3 + n_extra]        # per extra layer: wcat (2H,4H) bf16, bias (1,4H) f32
        fc_w_ref = refs[3 + n_extra]            # (H, C_pad) f32
        fc_b_ref = refs[4 + n_extra]            # (1, C_pad) f32
        out_ref = refs[5 + n_extra]             # (Bp, C_pad) f32

        V_pad = gtbl_ref.shape[0]

        # ---- Fused embedding lookup + layer-0 input projection + bias: one-hot MXU matmul.
        ids = ids_ref[...]                                              # (T*Bp, 1) int32
        vlane = lax.broadcasted_iota(jnp.int32, (T * Bp, V_pad), 1)
        onehot = (ids == vlane).astype(jnp.float32)                     # (T*Bp, V_pad)
        gx = jnp.dot(onehot, gtbl_ref[...],
                     preferred_element_type=jnp.float32)                # (T*Bp, 4H), stays in vregs

        # g-gate lane mask (lanes [2H,3H)).  Built once, reused by every unrolled step.
        lane = lax.broadcasted_iota(jnp.int32, (Bp, G), 1)
        g_mask = jnp.logical_and(lane >= 2 * H, lane < 3 * H)

        def cell(gates, c):
            # g columns were pre-scaled by 2 at init, so tanh(x) = 2*sigmoid(2x) - 1:
            # a single full-width sigmoid on the EUP + a VALU fixup for the g lanes.
            s = jax.nn.sigmoid(gates)
            acts = jnp.where(g_mask, 2.0 * s - 1.0, s)
            i = acts[:, 0 * H:1 * H]
            f = acts[:, 1 * H:2 * H]
            g = acts[:, 2 * H:3 * H]
            o = acts[:, 3 * H:4 * H]
            c_new = f * c + i * g
            h_new = o * jnp.tanh(c_new)
            return h_new, c_new

        # Hoist weight loads out of the unrolled recurrence.
        whh0 = whh0_ref[...]
        wcats = [layer_refs[2 * i][...] for i in range(num_layers - 1)]
        biases = [layer_refs[2 * i + 1][...] for i in range(num_layers - 1)]

        zeros = jnp.zeros((Bp, H), jnp.float32)
        h = [zeros] * num_layers
        c = [zeros] * num_layers
        inp = [None] * num_layers     # inp[l] = h output of layer l-1 at the timestep layer l needs

        # Wavefront schedule: at step s, layer l processes timestep t = s - l.  The per-layer
        # cells inside one wavefront step are mutually independent -> the scheduler overlaps them.
        for s in range(T + num_layers - 1):
            nxt = list(inp)
            for l in range(num_layers):
                t = s - l
                if not (0 <= t < T):
                    continue
                if l == 0:
                    gates = gx[t * Bp:(t + 1) * Bp, :] + jnp.dot(
                        h[0].astype(jnp.bfloat16), whh0,
                        preferred_element_type=jnp.float32)
                else:
                    xin = jnp.concatenate([inp[l], h[l]], axis=1).astype(jnp.bfloat16)
                    gates = jnp.dot(xin, wcats[l - 1],
                                    preferred_element_type=jnp.float32) + biases[l - 1]
                hn, cn = cell(gates, c[l])
                h[l], c[l] = hn, cn
                if l + 1 < num_layers:
                    nxt[l + 1] = hn
            inp = nxt

        # FC on the last timestep of the top layer.  Output padded to 128 lanes -> lane-dense store.
        out_ref[...] = jnp.dot(h[num_layers - 1], fc_w_ref[...],
                               preferred_element_type=jnp.float32) + fc_b_ref[...]

    return kernel


def _lstm_net_pallas(ids_tb, kernel_args, num_layers, Bp, T, H):
    kernel = _make_lstm_net_kernel(num_layers, Bp, T, H)
    C_pad = kernel_args[-1].shape[1]
    n_in = 1 + len(kernel_args)
    # TODO(synk): for large batches on v7x, add a leading batch grid axis with
    # dimension_semantics=("parallel",) so both TensorCores are used; pointless at Bp=8.
    return pl.pallas_call(
        kernel,
        out_shape=jax.ShapeDtypeStruct((Bp, C_pad), jnp.float32),
        in_specs=[pl.BlockSpec(memory_space=pltpu.MemorySpace.VMEM)] * n_in,
        out_specs=pl.BlockSpec(memory_space=pltpu.MemorySpace.VMEM),
    )(ids_tb, *kernel_args)


# ---------------------------------------------------------------------------
# Parameter initialization (deterministic, mimics PyTorch default inits) and
# weights-only kernel pre-transforms.
# ---------------------------------------------------------------------------
def init_params(cfg, key):
    keys = jax.random.split(key, 3 + 4 * cfg.layer_dim)
    ki = iter(keys)

    H = cfg.hidden_dim
    G = 4 * H

    # nn.Embedding: N(0, 1); padding_idx row zeroed at init.
    emb = jax.random.normal(next(ki), (cfg.n_vocab, cfg.embed), jnp.float32)
    emb = emb.at[cfg.n_vocab - 1].set(0.0)

    # nn.LSTM: uniform(-1/sqrt(H), 1/sqrt(H)) for all weights/biases.
    bound = 1.0 / jnp.sqrt(jnp.float32(H))
    lstm_layers = []
    for layer in range(cfg.layer_dim):
        in_dim = cfg.embed if layer == 0 else H
        w_ih = jax.random.uniform(next(ki), (G, in_dim), jnp.float32, -bound, bound)
        w_hh = jax.random.uniform(next(ki), (G, H), jnp.float32, -bound, bound)
        b_ih = jax.random.uniform(next(ki), (G,), jnp.float32, -bound, bound)
        b_hh = jax.random.uniform(next(ki), (G,), jnp.float32, -bound, bound)
        lstm_layers.append(dict(
            wih_t=jnp.transpose(w_ih),                    # (in_dim, 4H)
            whh_t=jnp.transpose(w_hh),                    # (H, 4H)
            bias=(b_ih + b_hh).reshape(1, -1),            # (1, 4H)
        ))

    # nn.Linear: uniform(-1/sqrt(H), 1/sqrt(H)).
    fc_w = jax.random.uniform(next(ki), (cfg.num_classes, H), jnp.float32, -bound, bound)
    fc_b = jax.random.uniform(next(ki), (cfg.num_classes,), jnp.float32, -bound, bound)

    # ---- Kernel-ready weight transforms (done once at init) ----
    # g-gate columns pre-scaled by 2 so the kernel can use tanh(x) = 2*sigmoid(2x) - 1.
    gscale = jnp.ones((1, G), jnp.float32).at[:, 2 * H:3 * H].set(2.0)

    # Layer 0: fused embedding/input-projection table with bias folded in, vocab padded to x8.
    V = cfg.n_vocab
    V_pad = max(8, ((V + 7) // 8) * 8)
    tbl = jnp.dot(emb, lstm_layers[0]["wih_t"], preferred_element_type=jnp.float32)
    tbl = (tbl + lstm_layers[0]["bias"]) * gscale
    gate_tbl0 = jnp.zeros((V_pad, G), jnp.float32).at[:V].set(tbl)       # (V_pad, 4H)

    whh0_prep = (lstm_layers[0]["whh_t"] * gscale).astype(jnp.bfloat16)  # (H, 4H) bf16

    extra = []
    for lp in lstm_layers[1:]:
        wcat = (jnp.concatenate([lp["wih_t"], lp["whh_t"]], axis=0) * gscale
                ).astype(jnp.bfloat16)                                   # (2H, 4H) bf16
        extra += [wcat, lp["bias"] * gscale]                             # bias stays f32

    # FC zero-padded to 128 output lanes for a lane-dense store.
    C = cfg.num_classes
    C_pad = max(128, ((C + 127) // 128) * 128)
    fc_w_pad = jnp.zeros((H, C_pad), jnp.float32).at[:, :C].set(jnp.transpose(fc_w))
    fc_b_pad = jnp.zeros((1, C_pad), jnp.float32).at[0, :C].set(fc_b)

    kernel_args = [gate_tbl0, whh0_prep] + extra + [fc_w_pad, fc_b_pad]

    return dict(
        embedding=emb,
        lstm=lstm_layers,
        fc_w_t=jnp.transpose(fc_w),        # (H, C)
        fc_b=fc_b.reshape(1, -1),          # (1, C)
        kernel_args=kernel_args,
    )


# ---------------------------------------------------------------------------
# Forward pass (matches LSTMNet.forward semantics).
# ---------------------------------------------------------------------------
@jax.jit
def lstm_net_forward(params, token_ids):
    """token_ids: (B, T) int32.  Returns (B, num_classes) f32."""
    B, T = token_ids.shape
    H = params["lstm"][0]["whh_t"].shape[0]
    C = params["fc_w_t"].shape[1]
    num_layers = len(params["lstm"])
    pad_id = params["embedding"].shape[0] - 1   # padding_idx -> zero embedding row

    # Pad the batch to a full sublane group (>= 8 rows); padded rows are discarded.
    Bp = max(8, ((B + 7) // 8) * 8)
    ids_p = jnp.full((Bp, T), pad_id, dtype=jnp.int32)
    ids_p = ids_p.at[:B, :].set(token_ids.astype(jnp.int32))
    # Time-major row layout for the in-kernel one-hot matmul: row t*Bp + b = token (b, t).
    ids_tb = jnp.transpose(ids_p).reshape(T * Bp, 1)

    logits_p = _lstm_net_pallas(ids_tb, params["kernel_args"], num_layers, Bp, T, H)
    return logits_p[:B, :C]


# ---------------------------------------------------------------------------
# Pure-JAX f32 reference (PyTorch-faithful) for a sanity check of the kernel path.
# ---------------------------------------------------------------------------
def lstm_net_reference(params, token_ids):
    out = jnp.take(params["embedding"], token_ids, axis=0)
    x = jnp.transpose(out, (1, 0, 2))
    for lp in params["lstm"]:
        T, B, _ = x.shape
        H = lp["whh_t"].shape[0]
        h = jnp.zeros((B, H), jnp.float32)
        c = jnp.zeros((B, H), jnp.float32)
        hs = []
        for t in range(T):
            gates = x[t] @ lp["wih_t"] + h @ lp["whh_t"] + lp["bias"]
            i = jax.nn.sigmoid(gates[:, 0 * H:1 * H])
            f = jax.nn.sigmoid(gates[:, 1 * H:2 * H])
            g = jnp.tanh(gates[:, 2 * H:3 * H])
            o = jax.nn.sigmoid(gates[:, 3 * H:4 * H])
            c = f * c + i * g
            h = o * jnp.tanh(c)
            hs.append(h)
        x = jnp.stack(hs, axis=0)
    return x[-1] @ params["fc_w_t"] + params["fc_b"]


if __name__ == "__main__":
    cfg = Config()
    B, T = 2, 8

    key = jax.random.PRNGKey(0)
    k_params, k_ids = jax.random.split(key)

    params = init_params(cfg, k_params)
    token_ids = jax.random.randint(k_ids, (B, T), 0, cfg.n_vocab, dtype=jnp.int32)

    # Module forward takes `x` where `x[0]` is the id tensor; mimic that.
    x = (token_ids,)

    logits = lstm_net_forward(params, x[0])
    jax.block_until_ready(logits)

    ref = lstm_net_reference(params, x[0])
    assert logits.shape == (B, cfg.num_classes)
    # Recurrent matmul operands are bf16 in the kernel (f32 accumulation / f32 state), so the
    # tolerance vs. the pure-f32 reference is slightly relaxed.
    assert jnp.allclose(logits, ref, atol=2e-2, rtol=2e-2), (logits, ref)

    print("KERNEL_OK")
</pallas_src>

<mosaic_0001>
module attributes {stable_mosaic.version = 11 : i64} {
  func.func @kernel(%arg0: memref<64x1xi32, #tpu.memory_space<vmem>>, %arg1: memref<56x128xf32, #tpu.memory_space<vmem>>, %arg2: memref<32x128xbf16, #tpu.memory_space<vmem>>, %arg3: memref<64x128xbf16, #tpu.memory_space<vmem>>, %arg4: memref<1x128xf32, #tpu.memory_space<vmem>>, %arg5: memref<32x128xf32, #tpu.memory_space<vmem>>, %arg6: memref<1x128xf32, #tpu.memory_space<vmem>>, %arg7: memref<8x128xf32, #tpu.memory_space<vmem>>) attributes {dimension_semantics = [], scalar_prefetch = 0 : i64, scratch_operands = 0 : i64, tpu.core_type = #tpu.core_type<tc>} {
    %c0 = arith.constant 0 : index
    %c0_0 = arith.constant 0 : index
    %0 = vector.load %arg0[%c0, %c0_0] : memref<64x1xi32, #tpu.memory_space<vmem>>, vector<64x1xi32>
    %1 = tpu.iota {dimensions = array<i32: 1>} : vector<64x56xi32>
    %2 = vector.broadcast %0 : vector<64x1xi32> to vector<64x56xi32>
    %3 = arith.cmpi eq, %2, %1 : vector<64x56xi32>
    %4 = arith.extui %3 : vector<64x56xi1> to vector<64x56xi32>
    %5 = arith.sitofp %4 : vector<64x56xi32> to vector<64x56xf32>
    %c0_1 = arith.constant 0 : index
    %c0_2 = arith.constant 0 : index
    %6 = vector.load %arg1[%c0_1, %c0_2] : memref<56x128xf32, #tpu.memory_space<vmem>>, vector<56x128xf32>
    %cst = arith.constant dense<0.000000e+00> : vector<64x128xf32>
    %7 = tpu.matmul %5, %6, %cst {dimension_numbers = #tpu.dot_dimension_numbers<[1], [0], [0], [1], [0, 0, 1, 1], [], []>} : vector<64x56xf32>, vector<56x128xf32>, vector<64x128xf32> -> vector<64x128xf32>
    %8 = tpu.iota {dimensions = array<i32: 1>} : vector<8x128xi32>
    %c64_i32 = arith.constant 64 : i32
    %9 = vector.broadcast %c64_i32 : i32 to vector<8x128xi32>
    %10 = arith.cmpi sge, %8, %9 : vector<8x128xi32>
    %c96_i32 = arith.constant 96 : i32
    %11 = vector.broadcast %c96_i32 : i32 to vector<8x128xi32>
    %12 = arith.cmpi slt, %8, %11 : vector<8x128xi32>
    %13 = arith.andi %10, %12 : vector<8x128xi1>
    %c0_3 = arith.constant 0 : index
    %c0_4 = arith.constant 0 : index
    %14 = vector.load %arg2[%c0_3, %c0_4] : memref<32x128xbf16, #tpu.memory_space<vmem>>, vector<32x128xbf16>
    %c0_5 = arith.constant 0 : index
    %c0_6 = arith.constant 0 : index
    %15 = vector.load %arg3[%c0_5, %c0_6] : memref<64x128xbf16, #tpu.memory_space<vmem>>, vector<64x128xbf16>
    %c0_7 = arith.constant 0 : index
    %c0_8 = arith.constant 0 : index
    %16 = vector.load %arg4[%c0_7, %c0_8] : memref<1x128xf32, #tpu.memory_space<vmem>>, vector<1x128xf32>
    %cst_9 = arith.constant 0.000000e+00 : f32
    %17 = vector.broadcast %cst_9 : f32 to vector<8x32xf32>
    %18 = vector.extract_strided_slice %7 {offsets = [0, 0], sizes = [8, 128], strides = [1, 1]} : vector<64x128xf32> to vector<8x128xf32>
    %19 = arith.truncf %17 : vector<8x32xf32> to vector<8x32xbf16>
    %cst_10 = arith.constant dense<0.000000e+00> : vector<8x128xf32>
    %20 = tpu.matmul %19, %14, %cst_10 {dimension_numbers = #tpu.dot_dimension_numbers<[1], [0], [0], [1], [0, 0, 1, 1], [], []>} : vector<8x32xbf16>, vector<32x128xbf16>, vector<8x128xf32> -> vector<8x128xf32>
    %21 = arith.addf %18, %20 : vector<8x128xf32>
    %22 = arith.negf %21 : vector<8x128xf32>
    %23 = math.exp %22 : vector<8x128xf32>
    %cst_11 = arith.constant 1.000000e+00 : f32
    %24 = vector.broadcast %cst_11 : f32 to vector<8x128xf32>
    %25 = arith.addf %24, %23 : vector<8x128xf32>
    %26 = arith.divf %24, %25 : vector<8x128xf32>
    %cst_12 = arith.constant 2.000000e+00 : f32
    %27 = vector.broadcast %cst_12 : f32 to vector<8x128xf32>
    %28 = arith.mulf %27, %26 : vector<8x128xf32>
    %cst_13 = arith.constant 1.000000e+00 : f32
    %29 = vector.broadcast %cst_13 : f32 to vector<8x128xf32>
    %30 = arith.subf %28, %29 : vector<8x128xf32>
    %31 = arith.select %13, %30, %26 : vector<8x128xi1>, vector<8x128xf32>
    %32 = vector.extract_strided_slice %31 {offsets = [0, 0], sizes = [8, 32], strides = [1, 1]} : vector<8x128xf32> to vector<8x32xf32>
    %33 = vector.extract_strided_slice %31 {offsets = [0, 32], sizes = [8, 32], strides = [1, 1]} : vector<8x128xf32> to vector<8x32xf32>
    %34 = vector.extract_strided_slice %31 {offsets = [0, 64], sizes = [8, 32], strides = [1, 1]} : vector<8x128xf32> to vector<8x32xf32>
    %35 = vector.extract_strided_slice %31 {offsets = [0, 96], sizes = [8, 32], strides = [1, 1]} : vector<8x128xf32> to vector<8x32xf32>
    %36 = arith.mulf %33, %17 : vector<8x32xf32>
    %37 = arith.mulf %32, %34 : vector<8x32xf32>
    %38 = arith.addf %36, %37 : vector<8x32xf32>
    %39 = math.tanh %38 : vector<8x32xf32>
    %40 = arith.mulf %35, %39 : vector<8x32xf32>
    %41 = vector.extract_strided_slice %7 {offsets = [8, 0], sizes = [8, 128], strides = [1, 1]} : vector<64x128xf32> to vector<8x128xf32>
    %42 = arith.truncf %40 : vector<8x32xf32> to vector<8x32xbf16>
    %cst_14 = arith.constant dense<0.000000e+00> : vector<8x128xf32>
    %43 = tpu.matmul %42, %14, %cst_14 {dimension_numbers = #tpu.dot_dimension_numbers<[1], [0], [0], [1], [0, 0, 1, 1], [], []>} : vector<8x32xbf16>, vector<32x128xbf16>, vector<8x128xf32> -> vector<8x128xf32>
    %44 = arith.addf %41, %43 : vector<8x128xf32>
    %45 = arith.negf %44 : vector<8x128xf32>
    %46 = math.exp %45 : vector<8x128xf32>
    %cst_15 = arith.constant 1.000000e+00 : f32
    %47 = vector.broadcast %cst_15 : f32 to vector<8x128xf32>
    %48 = arith.addf %47, %46 : vector<8x128xf32>
    %49 = arith.divf %47, %48 : vector<8x128xf32>
    %cst_16 = arith.constant 2.000000e+00 : f32
    %50 = vector.broadcast %cst_16 : f32 to vector<8x128xf32>
    %51 = arith.mulf %50, %49 : vector<8x128xf32>
    %cst_17 = arith.constant 1.000000e+00 : f32
    %52 = vector.broadcast %cst_17 : f32 to vector<8x128xf32>
    %53 = arith.subf %51, %52 : vector<8x128xf32>
    %54 = arith.select %13, %53, %49 : vector<8x128xi1>, vector<8x128xf32>
    %55 = vector.extract_strided_slice %54 {offsets = [0, 0], sizes = [8, 32], strides = [1, 1]} : vector<8x128xf32> to vector<8x32xf32>
    %56 = vector.extract_strided_slice %54 {offsets = [0, 32], sizes = [8, 32], strides = [1, 1]} : vector<8x128xf32> to vector<8x32xf32>
    %57 = vector.extract_strided_slice %54 {offsets = [0, 64], sizes = [8, 32], strides = [1, 1]} : vector<8x128xf32> to vector<8x32xf32>
    %58 = vector.extract_strided_slice %54 {offsets = [0, 96], sizes = [8, 32], strides = [1, 1]} : vector<8x128xf32> to vector<8x32xf32>
    %59 = arith.mulf %56, %38 : vector<8x32xf32>
    %60 = arith.mulf %55, %57 : vector<8x32xf32>
    %61 = arith.addf %59, %60 : vector<8x32xf32>
    %62 = math.tanh %61 : vector<8x32xf32>
    %63 = arith.mulf %58, %62 : vector<8x32xf32>
    %64 = tpu.concatenate %40, %17 in 1 : vector<8x32xf32>, vector<8x32xf32> -> vector<8x64xf32>
    %65 = arith.truncf %64 : vector<8x64xf32> to vector<8x64xbf16>
    %cst_18 = arith.constant dense<0.000000e+00> : vector<8x128xf32>
    %66 = tpu.matmul %65, %15, %cst_18 {dimension_numbers = #tpu.dot_dimension_numbers<[1], [0], [0], [1], [0, 0, 1, 1], [], []>} : vector<8x64xbf16>, vector<64x128xbf16>, vector<8x128xf32> -> vector<8x128xf32>
    %67 = vector.broadcast %16 : vector<1x128xf32> to vector<8x128xf32>
    %68 = arith.addf %66, %67 : vector<8x128xf32>
    %69 = arith.negf %68 : vector<8x128xf32>
    %70 = math.exp %69 : vector<8x128xf32>
    %cst_19 = arith.constant 1.000000e+00 : f32
    %71 = vector.broadcast %cst_19 : f32 to vector<8x128xf32>
    %72 = arith.addf %71, %70 : vector<8x128xf32>
    %73 = arith.divf %71, %72 : vector<8x128xf32>
    %cst_20 = arith.constant 2.000000e+00 : f32
    %74 = vector.broadcast %cst_20 : f32 to vector<8x128xf32>
    %75 = arith.mulf %74, %73 : vector<8x128xf32>
    %cst_21 = arith.constant 1.000000e+00 : f32
    %76 = vector.broadcast %cst_21 : f32 to vector<8x128xf32>
    %77 = arith.subf %75, %76 : vector<8x128xf32>
    %78 = arith.select %13, %77, %73 : vector<8x128xi1>, vector<8x128xf32>
    %79 = vector.extract_strided_slice %78 {offsets = [0, 0], sizes = [8, 32], strides = [1, 1]} : vector<8x128xf32> to vector<8x32xf32>
    %80 = vector.extract_strided_slice %78 {offsets = [0, 32], sizes = [8, 32], strides = [1, 1]} : vector<8x128xf32> to vector<8x32xf32>
    %81 = vector.extract_strided_slice %78 {offsets = [0, 64], sizes = [8, 32], strides = [1, 1]} : vector<8x128xf32> to vector<8x32xf32>
    %82 = vector.extract_strided_slice %78 {offsets = [0, 96], sizes = [8, 32], strides = [1, 1]} : vector<8x128xf32> to vector<8x32xf32>
    %83 = arith.mulf %80, %17 : vector<8x32xf32>
    %84 = arith.mulf %79, %81 : vector<8x32xf32>
    %85 = arith.addf %83, %84 : vector<8x32xf32>
    %86 = math.tanh %85 : vector<8x32xf32>
    %87 = arith.mulf %82, %86 : vector<8x32xf32>
    %88 = vector.extract_strided_slice %7 {offsets = [16, 0], sizes = [8, 128], strides = [1, 1]} : vector<64x128xf32> to vector<8x128xf32>
    %89 = arith.truncf %63 : vector<8x32xf32> to vector<8x32xbf16>
    %cst_22 = arith.constant dense<0.000000e+00> : vector<8x128xf32>
    %90 = tpu.matmul %89, %14, %cst_22 {dimension_numbers = #tpu.dot_dimension_numbers<[1], [0], [0], [1], [0, 0, 1, 1], [], []>} : vector<8x32xbf16>, vector<32x128xbf16>, vector<8x128xf32> -> vector<8x128xf32>
    %91 = arith.addf %88, %90 : vector<8x128xf32>
    %92 = arith.negf %91 : vector<8x128xf32>
    %93 = math.exp %92 : vector<8x128xf32>
    %cst_23 = arith.constant 1.000000e+00 : f32
    %94 = vector.broadcast %cst_23 : f32 to vector<8x128xf32>
    %95 = arith.addf %94, %93 : vector<8x128xf32>
    %96 = arith.divf %94, %95 : vector<8x128xf32>
    %cst_24 = arith.constant 2.000000e+00 : f32
    %97 = vector.broadcast %cst_24 : f32 to vector<8x128xf32>
    %98 = arith.mulf %97, %96 : vector<8x128xf32>
    %cst_25 = arith.constant 1.000000e+00 : f32
    %99 = vector.broadcast %cst_25 : f32 to vector<8x128xf32>
    %100 = arith.subf %98, %99 : vector<8x128xf32>
    %101 = arith.select %13, %100, %96 : vector<8x128xi1>, vector<8x128xf32>
    %102 = vector.extract_strided_slice %101 {offsets = [0, 0], sizes = [8, 32], strides = [1, 1]} : vector<8x128xf32> to vector<8x32xf32>
    %103 = vector.extract_strided_slice %101 {offsets = [0, 32], sizes = [8, 32], strides = [1, 1]} : vector<8x128xf32> to vector<8x32xf32>
    %104 = vector.extract_strided_slice %101 {offsets = [0, 64], sizes = [8, 32], strides = [1, 1]} : vector<8x128xf32> to vector<8x32xf32>
    %105 = vector.extract_strided_slice %101 {offsets = [0, 96], sizes = [8, 32], strides = [1, 1]} : vector<8x128xf32> to vector<8x32xf32>
    %106 = arith.mulf %103, %61 : vector<8x32xf32>
    %107 = arith.mulf %102, %104 : vector<8x32xf32>
    %108 = arith.addf %106, %107 : vector<8x32xf32>
    %109 = math.tanh %108 : vector<8x32xf32>
    %110 = arith.mulf %105, %109 : vector<8x32xf32>
    %111 = tpu.concatenate %63, %87 in 1 : vector<8x32xf32>, vector<8x32xf32> -> vector<8x64xf32>
    %112 = arith.truncf %111 : vector<8x64xf32> to vector<8x64xbf16>
    %cst_26 = arith.constant dense<0.000000e+00> : vector<8x128xf32>
    %113 = tpu.matmul %112, %15, %cst_26 {dimension_numbers = #tpu.dot_dimension_numbers<[1], [0], [0], [1], [0, 0, 1, 1], [], []>} : vector<8x64xbf16>, vector<64x128xbf16>, vector<8x128xf32> -> vector<8x128xf32>
    %114 = vector.broadcast %16 : vector<1x128xf32> to vector<8x128xf32>
    %115 = arith.addf %113, %114 : vector<8x128xf32>
    %116 = arith.negf %115 : vector<8x128xf32>
    %117 = math.exp %116 : vector<8x128xf32>
    %cst_27 = arith.constant 1.000000e+00 : f32
    %118 = vector.broadcast %cst_27 : f32 to vector<8x128xf32>
    %119 = arith.addf %118, %117 : vector<8x128xf32>
    %120 = arith.divf %118, %119 : vector<8x128xf32>
    %cst_28 = arith.constant 2.000000e+00 : f32
    %121 = vector.broadcast %cst_28 : f32 to vector<8x128xf32>
    %122 = arith.mulf %121, %120 : vector<8x128xf32>
    %cst_29 = arith.constant 1.000000e+00 : f32
    %123 = vector.broadcast %cst_29 : f32 to vector<8x128xf32>
    %124 = arith.subf %122, %123 : vector<8x128xf32>
    %125 = arith.select %13, %124, %120 : vector<8x128xi1>, vector<8x128xf32>
    %126 = vector.extract_strided_slice %125 {offsets = [0, 0], sizes = [8, 32], strides = [1, 1]} : vector<8x128xf32> to vector<8x32xf32>
    %127 = vector.extract_strided_slice %125 {offsets = [0, 32], sizes = [8, 32], strides = [1, 1]} : vector<8x128xf32> to vector<8x32xf32>
    %128 = vector.extract_strided_slice %125 {offsets = [0, 64], sizes = [8, 32], strides = [1, 1]} : vector<8x128xf32> to vector<8x32xf32>
    %129 = vector.extract_strided_slice %125 {offsets = [0, 96], sizes = [8, 32], strides = [1, 1]} : vector<8x128xf32> to vector<8x32xf32>
    %130 = arith.mulf %127, %85 : vector<8x32xf32>
    %131 = arith.mulf %126, %128 : vector<8x32xf32>
    %132 = arith.addf %130, %131 : vector<8x32xf32>
    %133 = math.tanh %132 : vector<8x32xf32>
    %134 = arith.mulf %129, %133 : vector<8x32xf32>
    %135 = vector.extract_strided_slice %7 {offsets = [24, 0], sizes = [8, 128], strides = [1, 1]} : vector<64x128xf32> to vector<8x128xf32>
    %136 = arith.truncf %110 : vector<8x32xf32> to vector<8x32xbf16>
    %cst_30 = arith.constant dense<0.000000e+00> : vector<8x128xf32>
    %137 = tpu.matmul %136, %14, %cst_30 {dimension_numbers = #tpu.dot_dimension_numbers<[1], [0], [0], [1], [0, 0, 1, 1], [], []>} : vector<8x32xbf16>, vector<32x128xbf16>, vector<8x128xf32> -> vector<8x128xf32>
    %138 = arith.addf %135, %137 : vector<8x128xf32>
    %139 = arith.negf %138 : vector<8x128xf32>
    %140 = math.exp %139 : vector<8x128xf32>
    %cst_31 = arith.constant 1.000000e+00 : f32
    %141 = vector.broadcast %cst_31 : f32 to vector<8x128xf32>
    %142 = arith.addf %141, %140 : vector<8x128xf32>
    %143 = arith.divf %141, %142 : vector<8x128xf32>
    %cst_32 = arith.constant 2.000000e+00 : f32
    %144 = vector.broadcast %cst_32 : f32 to vector<8x128xf32>
    %145 = arith.mulf %144, %143 : vector<8x128xf32>
    %cst_33 = arith.constant 1.000000e+00 : f32
    %146 = vector.broadcast %cst_33 : f32 to vector<8x128xf32>
    %147 = arith.subf %145, %146 : vector<8x128xf32>
    %148 = arith.select %13, %147, %143 : vector<8x128xi1>, vector<8x128xf32>
    %149 = vector.extract_strided_slice %148 {offsets = [0, 0], sizes = [8, 32], strides = [1, 1]} : vector<8x128xf32> to vector<8x32xf32>
    %150 = vector.extract_strided_slice %148 {offsets = [0, 32], sizes = [8, 32], strides = [1, 1]} : vector<8x128xf32> to vector<8x32xf32>
    %151 = vector.extract_strided_slice %148 {offsets = [0, 64], sizes = [8, 32], strides = [1, 1]} : vector<8x128xf32> to vector<8x32xf32>
    %152 = vector.extract_strided_slice %148 {offsets = [0, 96], sizes = [8, 32], strides = [1, 1]} : vector<8x128xf32> to vector<8x32xf32>
    %153 = arith.mulf %150, %108 : vector<8x32xf32>
    %154 = arith.mulf %149, %151 : vector<8x32xf32>
    %155 = arith.addf %153, %154 : vector<8x32xf32>
    %156 = math.tanh %155 : vector<8x32xf32>
    %157 = arith.mulf %152, %156 : vector<8x32xf32>
    %158 = tpu.concatenate %110, %134 in 1 : vector<8x32xf32>, vector<8x32xf32> -> vector<8x64xf32>
    %159 = arith.truncf %158 : vector<8x64xf32> to vector<8x64xbf16>
    %cst_34 = arith.constant dense<0.000000e+00> : vector<8x128xf32>
    %160 = tpu.matmul %159, %15, %cst_34 {dimension_numbers = #tpu.dot_dimension_numbers<[1], [0], [0], [1], [0, 0, 1, 1], [], []>} : vector<8x64xbf16>, vector<64x128xbf16>, vector<8x128xf32> -> vector<8x128xf32>
    %161 = vector.broadcast %16 : vector<1x128xf32> to vector<8x128xf32>
    %162 = arith.addf %160, %161 : vector<8x128xf32>
    %163 = arith.negf %162 : vector<8x128xf32>
    %164 = math.exp %163 : vector<8x128xf32>
    %cst_35 = arith.constant 1.000000e+00 : f32
    %165 = vector.broadcast %cst_35 : f32 to vector<8x128xf32>
    %166 = arith.addf %165, %164 : vector<8x128xf32>
    %167 = arith.divf %165, %166 : vector<8x128xf32>
    %cst_36 = arith.constant 2.000000e+00 : f32
    %168 = vector.broadcast %cst_36 : f32 to vector<8x128xf32>
    %169 = arith.mulf %168, %167 : vector<8x128xf32>
    %cst_37 = arith.constant 1.000000e+00 : f32
    %170 = vector.broadcast %cst_37 : f32 to vector<8x128xf32>
    %171 = arith.subf %169, %170 : vector<8x128xf32>
    %172 = arith.select %13, %171, %167 : vector<8x128xi1>, vector<8x128xf32>
    %173 = vector.extract_strided_slice %172 {offsets = [0, 0], sizes = [8, 32], strides = [1, 1]} : vector<8x128xf32> to vector<8x32xf32>
    %174 = vector.extract_strided_slice %172 {offsets = [0, 32], sizes = [8, 32], strides = [1, 1]} : vector<8x128xf32> to vector<8x32xf32>
    %175 = vector.extract_strided_slice %172 {offsets = [0, 64], sizes = [8, 32], strides = [1, 1]} : vector<8x128xf32> to vector<8x32xf32>
    %176 = vector.extract_strided_slice %172 {offsets = [0, 96], sizes = [8, 32], strides = [1, 1]} : vector<8x128xf32> to vector<8x32xf32>
    %177 = arith.mulf %174, %132 : vector<8x32xf32>
    %178 = arith.mulf %173, %175 : vector<8x32xf32>
    %179 = arith.addf %177, %178 : vector<8x32xf32>
    %180 = math.tanh %179 : vector<8x32xf32>
    %181 = arith.mulf %176, %180 : vector<8x32xf32>
    %182 = vector.extract_strided_slice %7 {offsets = [32, 0], sizes = [8, 128], strides = [1, 1]} : vector<64x128xf32> to vector<8x128xf32>
    %183 = arith.truncf %157 : vector<8x32xf32> to vector<8x32xbf16>
    %cst_38 = arith.constant dense<0.000000e+00> : vector<8x128xf32>
    %184 = tpu.matmul %183, %14, %cst_38 {dimension_numbers = #tpu.dot_dimension_numbers<[1], [0], [0], [1], [0, 0, 1, 1], [], []>} : vector<8x32xbf16>, vector<32x128xbf16>, vector<8x128xf32> -> vector<8x128xf32>
    %185 = arith.addf %182, %184 : vector<8x128xf32>
    %186 = arith.negf %185 : vector<8x128xf32>
    %187 = math.exp %186 : vector<8x128xf32>
    %cst_39 = arith.constant 1.000000e+00 : f32
    %188 = vector.broadcast %cst_39 : f32 to vector<8x128xf32>
    %189 = arith.addf %188, %187 : vector<8x128xf32>
    %190 = arith.divf %188, %189 : vector<8x128xf32>
    %cst_40 = arith.constant 2.000000e+00 : f32
    %191 = vector.broadcast %cst_40 : f32 to vector<8x128xf32>
    %192 = arith.mulf %191, %190 : vector<8x128xf32>
    %cst_41 = arith.constant 1.000000e+00 : f32
    %193 = vector.broadcast %cst_41 : f32 to vector<8x128xf32>
    %194 = arith.subf %192, %193 : vector<8x128xf32>
    %195 = arith.select %13, %194, %190 : vector<8x128xi1>, vector<8x128xf32>
    %196 = vector.extract_strided_slice %195 {offsets = [0, 0], sizes = [8, 32], strides = [1, 1]} : vector<8x128xf32> to vector<8x32xf32>
    %197 = vector.extract_strided_slice %195 {offsets = [0, 32], sizes = [8, 32], strides = [1, 1]} : vector<8x128xf32> to vector<8x32xf32>
    %198 = vector.extract_strided_slice %195 {offsets = [0, 64], sizes = [8, 32], strides = [1, 1]} : vector<8x128xf32> to vector<8x32xf32>
    %199 = vector.extract_strided_slice %195 {offsets = [0, 96], sizes = [8, 32], strides = [1, 1]} : vector<8x128xf32> to vector<8x32xf32>
    %200 = arith.mulf %197, %155 : vector<8x32xf32>
    %201 = arith.mulf %196, %198 : vector<8x32xf32>
    %202 = arith.addf %200, %201 : vector<8x32xf32>
    %203 = math.tanh %202 : vector<8x32xf32>
    %204 = arith.mulf %199, %203 : vector<8x32xf32>
    %205 = tpu.concatenate %157, %181 in 1 : vector<8x32xf32>, vector<8x32xf32> -> vector<8x64xf32>
    %206 = arith.truncf %205 : vector<8x64xf32> to vector<8x64xbf16>
    %cst_42 = arith.constant dense<0.000000e+00> : vector<8x128xf32>
    %207 = tpu.matmul %206, %15, %cst_42 {dimension_numbers = #tpu.dot_dimension_numbers<[1], [0], [0], [1], [0, 0, 1, 1], [], []>} : vector<8x64xbf16>, vector<64x128xbf16>, vector<8x128xf32> -> vector<8x128xf32>
    %208 = vector.broadcast %16 : vector<1x128xf32> to vector<8x128xf32>
    %209 = arith.addf %207, %208 : vector<8x128xf32>
    %210 = arith.negf %209 : vector<8x128xf32>
    %211 = math.exp %210 : vector<8x128xf32>
    %cst_43 = arith.constant 1.000000e+00 : f32
    %212 = vector.broadcast %cst_43 : f32 to vector<8x128xf32>
    %213 = arith.addf %212, %211 : vector<8x128xf32>
    %214 = arith.divf %212, %213 : vector<8x128xf32>
    %cst_44 = arith.constant 2.000000e+00 : f32
    %215 = vector.broadcast %cst_44 : f32 to vector<8x128xf32>
    %216 = arith.mulf %215, %214 : vector<8x128xf32>
    %cst_45 = arith.constant 1.000000e+00 : f32
    %217 = vector.broadcast %cst_45 : f32 to vector<8x128xf32>
    %218 = arith.subf %216, %217 : vector<8x128xf32>
    %219 = arith.select %13, %218, %214 : vector<8x128xi1>, vector<8x128xf32>
    %220 = vector.extract_strided_slice %219 {offsets = [0, 0], sizes = [8, 32], strides = [1, 1]} : vector<8x128xf32> to vector<8x32xf32>
    %221 = vector.extract_strided_slice %219 {offsets = [0, 32], sizes = [8, 32], strides = [1, 1]} : vector<8x128xf32> to vector<8x32xf32>
    %222 = vector.extract_strided_slice %219 {offsets = [0, 64], sizes = [8, 32], strides = [1, 1]} : vector<8x128xf32> to vector<8x32xf32>
    %223 = vector.extract_strided_slice %219 {offsets = [0, 96], sizes = [8, 32], strides = [1, 1]} : vector<8x128xf32> to vector<8x32xf32>
    %224 = arith.mulf %221, %179 : vector<8x32xf32>
    %225 = arith.mulf %220, %222 : vector<8x32xf32>
    %226 = arith.addf %224, %225 : vector<8x32xf32>
    %227 = math.tanh %226 : vector<8x32xf32>
    %228 = arith.mulf %223, %227 : vector<8x32xf32>
    %229 = vector.extract_strided_slice %7 {offsets = [40, 0], sizes = [8, 128], strides = [1, 1]} : vector<64x128xf32> to vector<8x128xf32>
    %230 = arith.truncf %204 : vector<8x32xf32> to vector<8x32xbf16>
    %cst_46 = arith.constant dense<0.000000e+00> : vector<8x128xf32>
    %231 = tpu.matmul %230, %14, %cst_46 {dimension_numbers = #tpu.dot_dimension_numbers<[1], [0], [0], [1], [0, 0, 1, 1], [], []>} : vector<8x32xbf16>, vector<32x128xbf16>, vector<8x128xf32> -> vector<8x128xf32>
    %232 = arith.addf %229, %231 : vector<8x128xf32>
    %233 = arith.negf %232 : vector<8x128xf32>
    %234 = math.exp %233 : vector<8x128xf32>
    %cst_47 = arith.constant 1.000000e+00 : f32
    %235 = vector.broadcast %cst_47 : f32 to vector<8x128xf32>
    %236 = arith.addf %235, %234 : vector<8x128xf32>
    %237 = arith.divf %235, %236 : vector<8x128xf32>
    %cst_48 = arith.constant 2.000000e+00 : f32
    %238 = vector.broadcast %cst_48 : f32 to vector<8x128xf32>
    %239 = arith.mulf %238, %237 : vector<8x128xf32>
    %cst_49 = arith.constant 1.000000e+00 : f32
    %240 = vector.broadcast %cst_49 : f32 to vector<8x128xf32>
    %241 = arith.subf %239, %240 : vector<8x128xf32>
    %242 = arith.select %13, %241, %237 : vector<8x128xi1>, vector<8x128xf32>
    %243 = vector.extract_strided_slice %242 {offsets = [0, 0], sizes = [8, 32], strides = [1, 1]} : vector<8x128xf32> to vector<8x32xf32>
    %244 = vector.extract_strided_slice %242 {offsets = [0, 32], sizes = [8, 32], strides = [1, 1]} : vector<8x128xf32> to vector<8x32xf32>
    %245 = vector.extract_strided_slice %242 {offsets = [0, 64], sizes = [8, 32], strides = [1, 1]} : vector<8x128xf32> to vector<8x32xf32>
    %246 = vector.extract_strided_slice %242 {offsets = [0, 96], sizes = [8, 32], strides = [1, 1]} : vector<8x128xf32> to vector<8x32xf32>
    %247 = arith.mulf %244, %202 : vector<8x32xf32>
    %248 = arith.mulf %243, %245 : vector<8x32xf32>
    %249 = arith.addf %247, %248 : vector<8x32xf32>
    %250 = math.tanh %249 : vector<8x32xf32>
    %251 = arith.mulf %246, %250 : vector<8x32xf32>
    %252 = tpu.concatenate %204, %228 in 1 : vector<8x32xf32>, vector<8x32xf32> -> vector<8x64xf32>
    %253 = arith.truncf %252 : vector<8x64xf32> to vector<8x64xbf16>
    %cst_50 = arith.constant dense<0.000000e+00> : vector<8x128xf32>
    %254 = tpu.matmul %253, %15, %cst_50 {dimension_numbers = #tpu.dot_dimension_numbers<[1], [0], [0], [1], [0, 0, 1, 1], [], []>} : vector<8x64xbf16>, vector<64x128xbf16>, vector<8x128xf32> -> vector<8x128xf32>
    %255 = vector.broadcast %16 : vector<1x128xf32> to vector<8x128xf32>
    %256 = arith.addf %254, %255 : vector<8x128xf32>
    %257 = arith.negf %256 : vector<8x128xf32>
    %258 = math.exp %257 : vector<8x128xf32>
    %cst_51 = arith.constant 1.000000e+00 : f32
    %259 = vector.broadcast %cst_51 : f32 to vector<8x128xf32>
    %260 = arith.addf %259, %258 : vector<8x128xf32>
    %261 = arith.divf %259, %260 : vector<8x128xf32>
    %cst_52 = arith.constant 2.000000e+00 : f32
    %262 = vector.broadcast %cst_52 : f32 to vector<8x128xf32>
    %263 = arith.mulf %262, %261 : vector<8x128xf32>
    %cst_53 = arith.constant 1.000000e+00 : f32
    %264 = vector.broadcast %cst_53 : f32 to vector<8x128xf32>
    %265 = arith.subf %263, %264 : vector<8x128xf32>
    %266 = arith.select %13, %265, %261 : vector<8x128xi1>, vector<8x128xf32>
    %267 = vector.extract_strided_slice %266 {offsets = [0, 0], sizes = [8, 32], strides = [1, 1]} : vector<8x128xf32> to vector<8x32xf32>
    %268 = vector.extract_strided_slice %266 {offsets = [0, 32], sizes = [8, 32], strides = [1, 1]} : vector<8x128xf32> to vector<8x32xf32>
    %269 = vector.extract_strided_slice %266 {offsets = [0, 64], sizes = [8, 32], strides = [1, 1]} : vector<8x128xf32> to vector<8x32xf32>
    %270 = vector.extract_strided_slice %266 {offsets = [0, 96], sizes = [8, 32], strides = [1, 1]} : vector<8x128xf32> to vector<8x32xf32>
    %271 = arith.mulf %268, %226 : vector<8x32xf32>
    %272 = arith.mulf %267, %269 : vector<8x32xf32>
    %273 = arith.addf %271, %272 : vector<8x32xf32>
    %274 = math.tanh %273 : vector<8x32xf32>
    %275 = arith.mulf %270, %274 : vector<8x32xf32>
    %276 = vector.extract_strided_slice %7 {offsets = [48, 0], sizes = [8, 128], strides = [1, 1]} : vector<64x128xf32> to vector<8x128xf32>
    %277 = arith.truncf %251 : vector<8x32xf32> to vector<8x32xbf16>
    %cst_54 = arith.constant dense<0.000000e+00> : vector<8x128xf32>
    %278 = tpu.matmul %277, %14, %cst_54 {dimension_numbers = #tpu.dot_dimension_numbers<[1], [0], [0], [1], [0, 0, 1, 1], [], []>} : vector<8x32xbf16>, vector<32x128xbf16>, vector<8x128xf32> -> vector<8x128xf32>
    %279 = arith.addf %276, %278 : vector<8x128xf32>
    %280 = arith.negf %279 : vector<8x128xf32>
    %281 = math.exp %280 : vector<8x128xf32>
    %cst_55 = arith.constant 1.000000e+00 : f32
    %282 = vector.broadcast %cst_55 : f32 to vector<8x128xf32>
    %283 = arith.addf %282, %281 : vector<8x128xf32>
    %284 = arith.divf %282, %283 : vector<8x128xf32>
    %cst_56 = arith.constant 2.000000e+00 : f32
    %285 = vector.broadcast %cst_56 : f32 to vector<8x128xf32>
    %286 = arith.mulf %285, %284 : vector<8x128xf32>
    %cst_57 = arith.constant 1.000000e+00 : f32
    %287 = vector.broadcast %cst_57 : f32 to vector<8x128xf32>
    %288 = arith.subf %286, %287 : vector<8x128xf32>
    %289 = arith.select %13, %288, %284 : vector<8x128xi1>, vector<8x128xf32>
    %290 = vector.extract_strided_slice %289 {offsets = [0, 0], sizes = [8, 32], strides = [1, 1]} : vector<8x128xf32> to vector<8x32xf32>
    %291 = vector.extract_strided_slice %289 {offsets = [0, 32], sizes = [8, 32], strides = [1, 1]} : vector<8x128xf32> to vector<8x32xf32>
    %292 = vector.extract_strided_slice %289 {offsets = [0, 64], sizes = [8, 32], strides = [1, 1]} : vector<8x128xf32> to vector<8x32xf32>
    %293 = vector.extract_strided_slice %289 {offsets = [0, 96], sizes = [8, 32], strides = [1, 1]} : vector<8x128xf32> to vector<8x32xf32>
    %294 = arith.mulf %291, %249 : vector<8x32xf32>
    %295 = arith.mulf %290, %292 : vector<8x32xf32>
    %296 = arith.addf %294, %295 : vector<8x32xf32>
    %297 = math.tanh %296 : vector<8x32xf32>
    %298 = arith.mulf %293, %297 : vector<8x32xf32>
    %299 = tpu.concatenate %251, %275 in 1 : vector<8x32xf32>, vector<8x32xf32> -> vector<8x64xf32>
    %300 = arith.truncf %299 : vector<8x64xf32> to vector<8x64xbf16>
    %cst_58 = arith.constant dense<0.000000e+00> : vector<8x128xf32>
    %301 = tpu.matmul %300, %15, %cst_58 {dimension_numbers = #tpu.dot_dimension_numbers<[1], [0], [0], [1], [0, 0, 1, 1], [], []>} : vector<8x64xbf16>, vector<64x128xbf16>, vector<8x128xf32> -> vector<8x128xf32>
    %302 = vector.broadcast %16 : vector<1x128xf32> to vector<8x128xf32>
    %303 = arith.addf %301, %302 : vector<8x128xf32>
    %304 = arith.negf %303 : vector<8x128xf32>
    %305 = math.exp %304 : vector<8x128xf32>
    %cst_59 = arith.constant 1.000000e+00 : f32
    %306 = vector.broadcast %cst_59 : f32 to vector<8x128xf32>
    %307 = arith.addf %306, %305 : vector<8x128xf32>
    %308 = arith.divf %306, %307 : vector<8x128xf32>
    %cst_60 = arith.constant 2.000000e+00 : f32
    %309 = vector.broadcast %cst_60 : f32 to vector<8x128xf32>
    %310 = arith.mulf %309, %308 : vector<8x128xf32>
    %cst_61 = arith.constant 1.000000e+00 : f32
    %311 = vector.broadcast %cst_61 : f32 to vector<8x128xf32>
    %312 = arith.subf %310, %311 : vector<8x128xf32>
    %313 = arith.select %13, %312, %308 : vector<8x128xi1>, vector<8x128xf32>
    %314 = vector.extract_strided_slice %313 {offsets = [0, 0], sizes = [8, 32], strides = [1, 1]} : vector<8x128xf32> to vector<8x32xf32>
    %315 = vector.extract_strided_slice %313 {offsets = [0, 32], sizes = [8, 32], strides = [1, 1]} : vector<8x128xf32> to vector<8x32xf32>
    %316 = vector.extract_strided_slice %313 {offsets = [0, 64], sizes = [8, 32], strides = [1, 1]} : vector<8x128xf32> to vector<8x32xf32>
    %317 = vector.extract_strided_slice %313 {offsets = [0, 96], sizes = [8, 32], strides = [1, 1]} : vector<8x128xf32> to vector<8x32xf32>
    %318 = arith.mulf %315, %273 : vector<8x32xf32>
    %319 = arith.mulf %314, %316 : vector<8x32xf32>
    %320 = arith.addf %318, %319 : vector<8x32xf32>
    %321 = math.tanh %320 : vector<8x32xf32>
    %322 = arith.mulf %317, %321 : vector<8x32xf32>
    %323 = vector.extract_strided_slice %7 {offsets = [56, 0], sizes = [8, 128], strides = [1, 1]} : vector<64x128xf32> to vector<8x128xf32>
    %324 = arith.truncf %298 : vector<8x32xf32> to vector<8x32xbf16>
    %cst_62 = arith.constant dense<0.000000e+00> : vector<8x128xf32>
    %325 = tpu.matmul %324, %14, %cst_62 {dimension_numbers = #tpu.dot_dimension_numbers<[1], [0], [0], [1], [0, 0, 1, 1], [], []>} : vector<8x32xbf16>, vector<32x128xbf16>, vector<8x128xf32> -> vector<8x128xf32>
    %326 = arith.addf %323, %325 : vector<8x128xf32>
    %327 = arith.negf %326 : vector<8x128xf32>
    %328 = math.exp %327 : vector<8x128xf32>
    %cst_63 = arith.constant 1.000000e+00 : f32
    %329 = vector.broadcast %cst_63 : f32 to vector<8x128xf32>
    %330 = arith.addf %329, %328 : vector<8x128xf32>
    %331 = arith.divf %329, %330 : vector<8x128xf32>
    %cst_64 = arith.constant 2.000000e+00 : f32
    %332 = vector.broadcast %cst_64 : f32 to vector<8x128xf32>
    %333 = arith.mulf %332, %331 : vector<8x128xf32>
    %cst_65 = arith.constant 1.000000e+00 : f32
    %334 = vector.broadcast %cst_65 : f32 to vector<8x128xf32>
    %335 = arith.subf %333, %334 : vector<8x128xf32>
    %336 = arith.select %13, %335, %331 : vector<8x128xi1>, vector<8x128xf32>
    %337 = vector.extract_strided_slice %336 {offsets = [0, 0], sizes = [8, 32], strides = [1, 1]} : vector<8x128xf32> to vector<8x32xf32>
    %338 = vector.extract_strided_slice %336 {offsets = [0, 32], sizes = [8, 32], strides = [1, 1]} : vector<8x128xf32> to vector<8x32xf32>
    %339 = vector.extract_strided_slice %336 {offsets = [0, 64], sizes = [8, 32], strides = [1, 1]} : vector<8x128xf32> to vector<8x32xf32>
    %340 = vector.extract_strided_slice %336 {offsets = [0, 96], sizes = [8, 32], strides = [1, 1]} : vector<8x128xf32> to vector<8x32xf32>
    %341 = arith.mulf %338, %296 : vector<8x32xf32>
    %342 = arith.mulf %337, %339 : vector<8x32xf32>
    %343 = arith.addf %341, %342 : vector<8x32xf32>
    %344 = math.tanh %343 : vector<8x32xf32>
    %345 = arith.mulf %340, %344 : vector<8x32xf32>
    %346 = tpu.concatenate %298, %322 in 1 : vector<8x32xf32>, vector<8x32xf32> -> vector<8x64xf32>
    %347 = arith.truncf %346 : vector<8x64xf32> to vector<8x64xbf16>
    %cst_66 = arith.constant dense<0.000000e+00> : vector<8x128xf32>
    %348 = tpu.matmul %347, %15, %cst_66 {dimension_numbers = #tpu.dot_dimension_numbers<[1], [0], [0], [1], [0, 0, 1, 1], [], []>} : vector<8x64xbf16>, vector<64x128xbf16>, vector<8x128xf32> -> vector<8x128xf32>
    %349 = vector.broadcast %16 : vector<1x128xf32> to vector<8x128xf32>
    %350 = arith.addf %348, %349 : vector<8x128xf32>
    %351 = arith.negf %350 : vector<8x128xf32>
    %352 = math.exp %351 : vector<8x128xf32>
    %cst_67 = arith.constant 1.000000e+00 : f32
    %353 = vector.broadcast %cst_67 : f32 to vector<8x128xf32>
    %354 = arith.addf %353, %352 : vector<8x128xf32>
    %355 = arith.divf %353, %354 : vector<8x128xf32>
    %cst_68 = arith.constant 2.000000e+00 : f32
    %356 = vector.broadcast %cst_68 : f32 to vector<8x128xf32>
    %357 = arith.mulf %356, %355 : vector<8x128xf32>
    %cst_69 = arith.constant 1.000000e+00 : f32
    %358 = vector.broadcast %cst_69 : f32 to vector<8x128xf32>
    %359 = arith.subf %357, %358 : vector<8x128xf32>
    %360 = arith.select %13, %359, %355 : vector<8x128xi1>, vector<8x128xf32>
    %361 = vector.extract_strided_slice %360 {offsets = [0, 0], sizes = [8, 32], strides = [1, 1]} : vector<8x128xf32> to vector<8x32xf32>
    %362 = vector.extract_strided_slice %360 {offsets = [0, 32], sizes = [8, 32], strides = [1, 1]} : vector<8x128xf32> to vector<8x32xf32>
    %363 = vector.extract_strided_slice %360 {offsets = [0, 64], sizes = [8, 32], strides = [1, 1]} : vector<8x128xf32> to vector<8x32xf32>
    %364 = vector.extract_strided_slice %360 {offsets = [0, 96], sizes = [8, 32], strides = [1, 1]} : vector<8x128xf32> to vector<8x32xf32>
    %365 = arith.mulf %362, %320 : vector<8x32xf32>
    %366 = arith.mulf %361, %363 : vector<8x32xf32>
    %367 = arith.addf %365, %366 : vector<8x32xf32>
    %368 = math.tanh %367 : vector<8x32xf32>
    %369 = arith.mulf %364, %368 : vector<8x32xf32>
    %370 = tpu.concatenate %345, %369 in 1 : vector<8x32xf32>, vector<8x32xf32> -> vector<8x64xf32>
    %371 = arith.truncf %370 : vector<8x64xf32> to vector<8x64xbf16>
    %cst_70 = arith.constant dense<0.000000e+00> : vector<8x128xf32>
    %372 = tpu.matmul %371, %15, %cst_70 {dimension_numbers = #tpu.dot_dimension_numbers<[1], [0], [0], [1], [0, 0, 1, 1], [], []>} : vector<8x64xbf16>, vector<64x128xbf16>, vector<8x128xf32> -> vector<8x128xf32>
    %373 = vector.broadcast %16 : vector<1x128xf32> to vector<8x128xf32>
    %374 = arith.addf %372, %373 : vector<8x128xf32>
    %375 = arith.negf %374 : vector<8x128xf32>
    %376 = math.exp %375 : vector<8x128xf32>
    %cst_71 = arith.constant 1.000000e+00 : f32
    %377 = vector.broadcast %cst_71 : f32 to vector<8x128xf32>
    %378 = arith.addf %377, %376 : vector<8x128xf32>
    %379 = arith.divf %377, %378 : vector<8x128xf32>
    %cst_72 = arith.constant 2.000000e+00 : f32
    %380 = vector.broadcast %cst_72 : f32 to vector<8x128xf32>
    %381 = arith.mulf %380, %379 : vector<8x128xf32>
    %cst_73 = arith.constant 1.000000e+00 : f32
    %382 = vector.broadcast %cst_73 : f32 to vector<8x128xf32>
    %383 = arith.subf %381, %382 : vector<8x128xf32>
    %384 = arith.select %13, %383, %379 : vector<8x128xi1>, vector<8x128xf32>
    %385 = vector.extract_strided_slice %384 {offsets = [0, 0], sizes = [8, 32], strides = [1, 1]} : vector<8x128xf32> to vector<8x32xf32>
    %386 = vector.extract_strided_slice %384 {offsets = [0, 32], sizes = [8, 32], strides = [1, 1]} : vector<8x128xf32> to vector<8x32xf32>
    %387 = vector.extract_strided_slice %384 {offsets = [0, 64], sizes = [8, 32], strides = [1, 1]} : vector<8x128xf32> to vector<8x32xf32>
    %388 = vector.extract_strided_slice %384 {offsets = [0, 96], sizes = [8, 32], strides = [1, 1]} : vector<8x128xf32> to vector<8x32xf32>
    %389 = arith.mulf %386, %367 : vector<8x32xf32>
    %390 = arith.mulf %385, %387 : vector<8x32xf32>
    %391 = arith.addf %389, %390 : vector<8x32xf32>
    %392 = math.tanh %391 : vector<8x32xf32>
    %393 = arith.mulf %388, %392 : vector<8x32xf32>
    %c0_74 = arith.constant 0 : index
    %c0_75 = arith.constant 0 : index
    %394 = vector.load %arg5[%c0_74, %c0_75] : memref<32x128xf32, #tpu.memory_space<vmem>>, vector<32x128xf32>
    %cst_76 = arith.constant dense<0.000000e+00> : vector<8x128xf32>
    %395 = tpu.matmul %393, %394, %cst_76 {dimension_numbers = #tpu.dot_dimension_numbers<[1], [0], [0], [1], [0, 0, 1, 1], [], []>} : vector<8x32xf32>, vector<32x128xf32>, vector<8x128xf32> -> vector<8x128xf32>
    %c0_77 = arith.constant 0 : index
    %c0_78 = arith.constant 0 : index
    %396 = vector.load %arg6[%c0_77, %c0_78] : memref<1x128xf32, #tpu.memory_space<vmem>>, vector<1x128xf32>
    %397 = vector.broadcast %396 : vector<1x128xf32> to vector<8x128xf32>
    %398 = arith.addf %395, %397 : vector<8x128xf32>
    %c0_79 = arith.constant 0 : index
    %c0_80 = arith.constant 0 : index
    %399 = vector.load %arg7[%c0_79, %c0_80] : memref<8x128xf32, #tpu.memory_space<vmem>>, vector<8x128xf32>
    tpu.vector_store %arg7[%c0_79, %c0_80], %398 {strides = array<i32>} : memref<8x128xf32, #tpu.memory_space<vmem>>, vector<8x128xf32>,
    return
  }
}

</mosaic_0001>

<llo_original>
// kernel: lstm_net_forward.1
$region0: #{lstm_net_forward.1}
  #allocation0 [shape = 'u32[]', space=smem, size = 0x4, offset = 0x4, fixed_abs, tag = 'smem constant byte address 0x4 - core index']
  #allocation1 [shape = 'u32[144,128]{1,0:T(1,128)}', space=vmem, size = 0x12000, scoped, tag = 'internal scratch']
  %s0 = inlined_call_operand.vmem [shape: s32[64,1], index: 0, kind: input, shape index: {}]
  %s1 = inlined_call_operand.vmem [shape: f32[56,128], index: 1, kind: input, shape index: {}]
  %s2 = inlined_call_operand.hbm [shape: bf16[32,128], index: 2, kind: input, shape index: {}]
  %s3 = inlined_call_operand.vmem [shape: bf16[64,128], index: 3, kind: input, shape index: {}]
  %s4 = inlined_call_operand.vmem [shape: f32[1,128], index: 4, kind: input, shape index: {}]
  %s5 = inlined_call_operand.hbm [shape: f32[32,128], index: 5, kind: input, shape index: {}]
  %s6 = inlined_call_operand.vmem [shape: f32[1,128], index: 6, kind: input, shape index: {}]
  %s7 = inlined_call_operand.vmem [shape: f32[8,128], index: 7, kind: output, shape index: {}]
  %s8 = sld [smem:[#allocation0]]
  $region46: #{lstm_net_forward.1} parent=0
    _
  %s10 = ssub.s32 1, %s8
  %s11 = scalar_select 0, %s10, %s8
  $region1: #{lstm_net_forward.1} parent=0
    #allocation2 [shape = 'u8[8192]{0}', space=vmem, size = 0x2000, scoped, tag = 'input window, operand 2, single buffered']
    #allocation3 [shape = 's32[1]{0}', space=sflag, size = 0x4, scoped, tag = 'scoped memory for lstm_net_forward.1']
    #allocation4 [shape = 'u8[16384]{0}', space=vmem, size = 0x4000, scoped, tag = 'input window, operand 5, single buffered']
    #allocation5 [shape = 's32[1]{0}', space=sflag, size = 0x4, scoped, tag = 'scoped memory for lstm_net_forward.1']
    %12 = vsyncpa [#allocation3], 0
    %13 = vsyncpa [#allocation5], 0
    // Predicated region
    $region2: #{lstm_net_forward.1} parent=1 // pred_check
      _
    $region3: #{lstm_net_forward.1} parent=1 // pred_check_branch
      %15 = sbr.rel (0) target = $region5
    $region4: #{lstm_net_forward.1} parent=1 // pred_region
      _
    $region5: #{lstm_net_forward.1} parent=1 // pred_fallthru
      _
    // Predicated region
    $region6: #{lstm_net_forward.1} parent=1 // pred_check
      _
    $region7: #{lstm_net_forward.1} parent=1 // pred_check_branch
      %17 = sbr.rel (0) target = $region9
    $region8: #{lstm_net_forward.1} parent=1 // pred_region
      _
    $region9: #{lstm_net_forward.1} parent=1 // pred_fallthru
      _
    // Predicated region
    $region10: #{lstm_net_forward.1} parent=1 // pred_check
      _
    $region11: #{lstm_net_forward.1} parent=1 // pred_check_branch
      %19 = sbr.rel (0) target = $region13
    $region12: #{lstm_net_forward.1} parent=1 // pred_region
      %s21 = ssub.s32 256, 256
      %22 = vsyncadd [#allocation3], %s21
      %s23 = sshll.u32 [#allocation2], 4
      %s24 = int_to_ptr.vmem [resolvable:$true] %s23
      %29 = dma.hbm_to_vmem [thread:$0]  %s2, 256, %s24, [#allocation3], 64, 64, 4
    $region13: #{lstm_net_forward.1} parent=1 // pred_fallthru
      _
    // Predicated region
    $region14: #{lstm_net_forward.1} parent=1 // pred_check
      _
    $region15: #{lstm_net_forward.1} parent=1 // pred_check_branch
      %31 = sbr.rel (0) target = $region17
    $region16: #{lstm_net_forward.1} parent=1 // pred_region
      _
    $region17: #{lstm_net_forward.1} parent=1 // pred_fallthru
      _
    // Predicated region
    $region18: #{lstm_net_forward.1} parent=1 // pred_check
      _
    $region19: #{lstm_net_forward.1} parent=1 // pred_check_branch
      %33 = sbr.rel (0) target = $region21
    $region20: #{lstm_net_forward.1} parent=1 // pred_region
      _
    $region21: #{lstm_net_forward.1} parent=1 // pred_fallthru
      _
    // Predicated region
    $region22: #{lstm_net_forward.1} parent=1 // pred_check
      _
    $region23: #{lstm_net_forward.1} parent=1 // pred_check_branch
      %35 = sbr.rel (0) target = $region25
    $region24: #{lstm_net_forward.1} parent=1 // pred_region
      %s37 = ssub.s32 512, 512
      %38 = vsyncadd [#allocation5], %s37
      %s39 = sshll.u32 [#allocation4], 4
      %s40 = int_to_ptr.vmem [resolvable:$true] %s39
      %45 = dma.hbm_to_vmem [thread:$0]  %s5, 512, %s40, [#allocation5], 128, 128, 8
    $region25: #{lstm_net_forward.1} parent=1 // pred_fallthru
      _
    // Predicated region
    $region26: #{lstm_net_forward.1} parent=1 // pred_check
      _
    $region27: #{lstm_net_forward.1} parent=1 // pred_check_branch
      %47 = sbr.rel (0) target = $region29
    $region28: #{lstm_net_forward.1} parent=1 // pred_region
      _
    $region29: #{lstm_net_forward.1} parent=1 // pred_fallthru
      _
    // Predicated region
    $region30: #{lstm_net_forward.1} parent=1 // pred_check
      _
    $region31: #{lstm_net_forward.1} parent=1 // pred_check_branch
      %49 = sbr.rel (0) target = $region33
    $region32: #{lstm_net_forward.1} parent=1 // pred_region
      %50 = dma.done [#allocation3], 256
    $region33: #{lstm_net_forward.1} parent=1 // pred_fallthru
      _
    // Predicated region
    $region34: #{lstm_net_forward.1} parent=1 // pred_check
      _
    $region35: #{lstm_net_forward.1} parent=1 // pred_check_branch
      %52 = sbr.rel (0) target = $region37
    $region36: #{lstm_net_forward.1} parent=1 // pred_region
      %53 = dma.done [#allocation5], 512
    $region37: #{lstm_net_forward.1} parent=1 // pred_fallthru
      _
    %v55 = vld [vmem:[%s0] sm:$0xff]
    %v56 = vld [vmem:[%s0 + $0x8] sm:$0xff]
    %v57 = vld [vmem:[%s0 + $0x10] sm:$0xff]
    %v58 = vld [vmem:[%s0 + $0x18] sm:$0xff]
    %v59 = vld [vmem:[%s0 + $0x20] sm:$0xff]
    %v60 = vld [vmem:[%s0 + $0x28] sm:$0xff]
    %v61 = vld [vmem:[%s0 + $0x30] sm:$0xff]
    %v62 = vld [vmem:[%s0 + $0x38] sm:$0xff]
    %v63 = vlaneseq
    %v64 = vand.u32 %v63, 127
    %65 = vset.pattern.permute.xlu0 0
    %66 = vperm.xlu0 %65, %v55
    %v67 = vpop.permute.xlu0 %66
    %68 = vset.pattern.permute.xlu0 0
    %69 = vperm.xlu0 %68, %v56
    %v70 = vpop.permute.xlu0 %69
    %71 = vset.pattern.permute.xlu0 0
    %72 = vperm.xlu0 %71, %v57
    %v73 = vpop.permute.xlu0 %72
    %74 = vset.pattern.permute.xlu0 0
    %75 = vperm.xlu0 %74, %v58
    %v76 = vpop.permute.xlu0 %75
    %77 = vset.pattern.permute.xlu0 0
    %78 = vperm.xlu0 %77, %v59
    %v79 = vpop.permute.xlu0 %78
    %80 = vset.pattern.permute.xlu0 0
    %81 = vperm.xlu0 %80, %v60
    %v82 = vpop.permute.xlu0 %81
    %83 = vset.pattern.permute.xlu0 0
    %84 = vperm.xlu0 %83, %v61
    %v85 = vpop.permute.xlu0 %84
    %86 = vset.pattern.permute.xlu0 0
    %87 = vperm.xlu0 %86, %v62
    %v88 = vpop.permute.xlu0 %87
    %vm89 = vcmp.eq.s32.totalorder %v67, %v64
    %vm90 = vcmp.eq.s32.totalorder %v70, %v64
    %vm91 = vcmp.eq.s32.totalorder %v73, %v64
    %vm92 = vcmp.eq.s32.totalorder %v76, %v64
    %vm93 = vcmp.eq.s32.totalorder %v79, %v64
    %vm94 = vcmp.eq.s32.totalorder %v82, %v64
    %vm95 = vcmp.eq.s32.totalorder %v85, %v64
    %vm96 = vcmp.eq.s32.totalorder %v88, %v64
    %v97 = vsel %vm89, 1, 0
    %v98 = vsel %vm90, 1, 0
    %v99 = vsel %vm91, 1, 0
    %v100 = vsel %vm92, 1, 0
    %v101 = vsel %vm93, 1, 0
    %v102 = vsel %vm94, 1, 0
    %v103 = vsel %vm95, 1, 0
    %v104 = vsel %vm96, 1, 0
    %v105 = vcvt.s32.f32 %v97
    %v106 = vcvt.s32.f32 %v98
    %v107 = vcvt.s32.f32 %v99
    %v108 = vcvt.s32.f32 %v100
    %v109 = vcvt.s32.f32 %v101
    %v110 = vcvt.s32.f32 %v102
    %v111 = vcvt.s32.f32 %v103
    %v112 = vcvt.s32.f32 %v104
    %v113 = vld [vmem:[%s1] sm:$0xff]
    %v114 = vld [vmem:[%s1 + $0x8] sm:$0xff]
    %v115 = vld [vmem:[%s1 + $0x10] sm:$0xff]
    %v116 = vld [vmem:[%s1 + $0x18] sm:$0xff]
    %v117 = vld [vmem:[%s1 + $0x20] sm:$0xff]
    %v118 = vld [vmem:[%s1 + $0x28] sm:$0xff]
    %v119 = vld [vmem:[%s1 + $0x30] sm:$0xff]
    %vm120 = vcmask 457728
    %v122 = vsel %vm120, %v105, 0
    %v125 = vsel %vm120, %v106, 0
    %v128 = vsel %vm120, %v107, 0
    %v131 = vsel %vm120, %v108, 0
    %v134 = vsel %vm120, %v109, 0
    %v137 = vsel %vm120, %v110, 0
    %v140 = vsel %vm120, %v111, 0
    %v143 = vsel %vm120, %v112, 0
    %145 = vmatprep.subr.mxu0 0.0
    %146 = vmatpush1.msra.mxu0 %v113
    %147 = vmatprep.subr.mxu0 0.0
    %148 = vmatpush1.msra.mxu0 %v114
    %149 = vmatprep.subr.mxu0 0.0
    %150 = vmatpush1.msra.mxu0 %v115
    %151 = vmatprep.subr.mxu0 0.0
    %152 = vmatpush1.msra.mxu0 %v116
    %153 = vmatprep.subr.mxu0 0.0
    %154 = vmatpush1.msra.mxu0 %v117
    %155 = vmatprep.subr.mxu0 0.0
    %156 = vmatpush1.msra.mxu0 %v118
    %157 = vmatprep.subr.mxu0 0.0
    %158 = vmatpush1.msra.mxu0 %v119
    %159 = vmatprep.subr.mxu0 0.0
    %160 = vmatpush1.msra.mxu0 0.0
    %161 = vmatprep.subr.mxu0 0.0
    %162 = vmatpush1.msra.mxu0 0.0
    %163 = vmatprep.subr.mxu0 0.0
    %164 = vmatpush1.msra.mxu0 0.0
    %165 = vmatprep.subr.mxu0 0.0
    %166 = vmatpush1.msra.mxu0 0.0
    %167 = vmatprep.subr.mxu0 0.0
    %168 = vmatpush1.msra.mxu0 0.0
    %169 = vmatprep.subr.mxu0 0.0
    %170 = vmatpush1.msra.mxu0 0.0
    %171 = vmatprep.subr.mxu0 0.0
    %172 = vmatpush1.msra.mxu0 0.0
    %173 = vmatprep.subr.mxu0 0.0
    %174 = vmatpush1.msra.mxu0 0.0
    %175 = vmatprep.subr.mxu0 0.0
    %176 = vmatpush1.msra.mxu0 0.0
    %177 = vmatprep.subr.mxu0 0.0
    %178 = vmatpush1.msra.mxu0 0.0
    %179 = vmatprep.subr.mxu0 0.0
    %180 = vmatpush1.msra.mxu0 0.0
    %181 = vmatprep.subr.mxu0 0.0
    %182 = vmatpush1.msra.mxu0 0.0
    %183 = vmatprep.subr.mxu0 0.0
    %184 = vmatpush1.msra.mxu0 0.0
    %185 = vmatprep.subr.mxu0 0.0
    %186 = vmatpush1.msra.mxu0 0.0
    %187 = vmatprep.subr.mxu0 0.0
    %188 = vmatpush1.msra.mxu0 0.0
    %189 = vmatprep.subr.mxu0 0.0
    %190 = vmatpush1.msra.mxu0 0.0
    %191 = vmatprep.subr.mxu0 0.0
    %192 = vmatpush1.msra.mxu0 0.0
    %193 = vmatprep.subr.mxu0 0.0
    %194 = vmatpush1.msra.mxu0 0.0
    %195 = vmatprep.subr.mxu0 0.0
    %196 = vmatpush1.msra.mxu0 0.0
    %197 = vmatprep.subr.mxu0 0.0
    %198 = vmatpush1.msra.mxu0 0.0
    %199 = vmatprep.subr.mxu0 0.0
    %200 = vmatpush1.msra.mxu0 0.0
    %201 = vmatprep.subr.mxu0 0.0
    %202 = vmatpush1.msra.mxu0 0.0
    %203 = vmatprep.subr.mxu0 0.0
    %204 = vmatpush1.msra.mxu0 0.0
    %205 = vmatprep.subr.mxu0 0.0
    %206 = vmatpush1.msra.mxu0 0.0
    %207 = vmatprep.subr.mxu0 0.0
    %208 = vmatpush1.msra.mxu0 0.0
    %209 = vmatprep.mubr.f32.mxu0 0.0
    %210 = vmatmul.mubr.f32.gmra.mrb[0].mxu0 %v122
    %v211 = vpop.f32.mrb[0].mxu0
    %v212 = vadd.f32 0.0, %v211
    %v213 = vpop.f32.mrb[0].mxu0
    %214 = vmatprep.mubr.f32.mxu0 0.0
    %215 = vmatmul.mubr.f32.gmra.mrb[0].mxu0 %v125
    %v216 = vpop.f32.mrb[0].mxu0
    %v217 = vadd.f32 0.0, %v216
    %v218 = vpop.f32.mrb[0].mxu0
    %219 = vmatprep.mubr.f32.mxu0 0.0
    %220 = vmatmul.mubr.f32.gmra.mrb[0].mxu0 %v128
    %v221 = vpop.f32.mrb[0].mxu0
    %v222 = vadd.f32 0.0, %v221
    %v223 = vpop.f32.mrb[0].mxu0
    %224 = vmatprep.mubr.f32.mxu0 0.0
    %225 = vmatmul.mubr.f32.gmra.mrb[0].mxu0 %v131
    %v226 = vpop.f32.mrb[0].mxu0
    %v227 = vadd.f32 0.0, %v226
    %v228 = vpop.f32.mrb[0].mxu0
    %229 = vmatprep.mubr.f32.mxu0 0.0
    %230 = vmatmul.mubr.f32.gmra.mrb[0].mxu0 %v134
    %v231 = vpop.f32.mrb[0].mxu0
    %v232 = vadd.f32 0.0, %v231
    %v233 = vpop.f32.mrb[0].mxu0
    %234 = vmatprep.mubr.f32.mxu0 0.0
    %235 = vmatmul.mubr.f32.gmra.mrb[0].mxu0 %v137
    %v236 = vpop.f32.mrb[0].mxu0
    %v237 = vadd.f32 0.0, %v236
    %v238 = vpop.f32.mrb[0].mxu0
    %239 = vmatprep.mubr.f32.mxu0 0.0
    %240 = vmatmul.mubr.f32.gmra.mrb[0].mxu0 %v140
    %v241 = vpop.f32.mrb[0].mxu0
    %v242 = vadd.f32 0.0, %v241
    %v243 = vpop.f32.mrb[0].mxu0
    %244 = vmatprep.mubr.f32.mxu0 0.0
    %245 = vmatmul.mubr.f32.gmra.mrb[0].mxu0 %v143
    %v246 = vpop.f32.mrb[0].mxu0
    %v247 = vadd.f32 0.0, %v246
    %v248 = vpop.f32.mrb[0].mxu0
    %249 = vdwg.mxu0
    %vm250 = vcmp.ge.s32.totalorder %v64, 64
    %vm251 = vcmp.lt.s32.totalorder %v64, 96
    %vm252 = vmand %vm250, %vm251
    %v253 = vld [vmem:[#allocation2] sm:$0xf]
    %v254 = vld [vmem:[#allocation2 + $0x4] sm:$0xf]
    %v255 = vld [vmem:[#allocation2 + $0x8] sm:$0xf]
    %v256 = vld [vmem:[#allocation2 + $0xc] sm:$0xf]
    %v257 = vld [vmem:[%s3] sm:$0xf]
    %v258 = vld [vmem:[%s3 + $0x4] sm:$0xf]
    %v259 = vld [vmem:[%s3 + $0x8] sm:$0xf]
    %v260 = vld [vmem:[%s3 + $0xc] sm:$0xf]
    %v261 = vld [vmem:[%s3 + $0x10] sm:$0xf]
    %v262 = vld [vmem:[%s3 + $0x14] sm:$0xf]
    %v263 = vld [vmem:[%s3 + $0x18] sm:$0xf]
    %v264 = vld [vmem:[%s3 + $0x1c] sm:$0xf]
    %v265 = vld [vmem:[%s4] sm:$0x1]
    %v270 = vunpack.c.l.b16 %v253
    %v271 = vunpack.c.l.b16 %v254
    %v272 = vunpack.c.l.b16 %v255
    %v273 = vunpack.c.l.b16 %v256
    %v274 = vpack.c.b16 %v271, %v270
    %v275 = vpack.c.b16 %v273, %v272
    %vm278 = vcmask 261120
    %v280 = vsel %vm278, 0, 0
    %282 = vmatprep.subr.bf16.mxu0 0
    %283 = vmatpush1.bf16.msra.mxu0 %v274
    %284 = vmatprep.subr.bf16.mxu0 0
    %285 = vmatpush1.bf16.msra.mxu0 %v275
    %286 = vmatprep.subr.bf16.mxu0 0
    %287 = vmatpush1.bf16.msra.mxu0 0
    %288 = vmatprep.subr.bf16.mxu0 0
    %289 = vmatpush1.bf16.msra.mxu0 0
    %290 = vmatprep.subr.bf16.mxu0 0
    %291 = vmatpush1.bf16.msra.mxu0 0
    %292 = vmatprep.subr.bf16.mxu0 0
    %293 = vmatpush1.bf16.msra.mxu0 0
    %294 = vmatprep.subr.bf16.mxu0 0
    %295 = vmatpush1.bf16.msra.mxu0 0
    %296 = vmatprep.subr.bf16.mxu0 0
    %297 = vmatpush1.bf16.msra.mxu0 0
    %298 = vmatprep.subr.bf16.mxu0 0
    %299 = vmatpush1.bf16.msra.mxu0 0
    %300 = vmatprep.subr.bf16.mxu0 0
    %301 = vmatpush1.bf16.msra.mxu0 0
    %302 = vmatprep.subr.bf16.mxu0 0
    %303 = vmatpush1.bf16.msra.mxu0 0
    %304 = vmatprep.subr.bf16.mxu0 0
    %305 = vmatpush1.bf16.msra.mxu0 0
    %306 = vmatprep.subr.bf16.mxu0 0
    %307 = vmatpush1.bf16.msra.mxu0 0
    %308 = vmatprep.subr.bf16.mxu0 0
    %309 = vmatpush1.bf16.msra.mxu0 0
    %310 = vmatprep.subr.bf16.mxu0 0
    %311 = vmatpush1.bf16.msra.mxu0 0
    %312 = vmatprep.subr.bf16.mxu0 0
    %313 = vmatpush1.bf16.msra.mxu0 0
    %314 = vmatprep.mubr.bf16.mxu0 0
    %315 = vmatmul.mubr.bf16.gmra.mrb[0].mxu0 %v280
    %v316 = vpop.f32.mrb[0].mxu0
    %v317 = vadd.f32 0.0, %v316
    %v318 = vpop.f32.mrb[0].mxu0
    %v319 = vpop.f32.mrb[0].mxu0
    %v320 = vpop.f32.mrb[0].mxu0
    %321 = vdwg.mxu0
    %v322 = vadd.f32 %v212, %v317
    %v323 = vxor.u32 %v322, 2147483648
    %v324 = vmul.f32 %v323, 1.442695
    %v325 = vpow.pop %v324
    %v326 = vadd.f32 %v325, 1.0
    %v327 = vrcp.pop %v326
    %v328 = vmul.f32 1.0, %v327
    %v329 = vmul.f32 %v328, 2.0
    %v330 = vsub.f32 %v329, 1.0
    %v331 = vsel %vm252, %v330, %v328
    %v332 = vmul.f32 %v331, 0.0
    %334 = vrot.lane.b32.xlu0 %v331, 64
    %v335 = vpop.permute.xlu0 %334
    %v337 = vmul.f32 %v331, %v335
    %339 = vrot.lane.b32.xlu0 %v337, 32
    %v340 = vpop.permute.xlu0 %339
    %v342 = vadd.f32 %v332, %v340
    %v343 = vtanh.pop %v342
    %345 = vrot.lane.b32.xlu0 %v343, 64
    %v346 = vpop.permute.xlu0 %345
    %v348 = vmul.f32 %v331, %v346
    %v349 = vpack.c.bf16 %v348, %v348
    %351 = vrot.lane.b32.xlu0 %v349, 32
    %v352 = vpop.permute.xlu0 %351
    %v354 = vsel %vm278, %v352, 0
    %356 = vmatprep.subr.bf16.mxu0 0
    %357 = vmatpush1.bf16.msra.mxu0 %v274
    %358 = vmatprep.subr.bf16.mxu0 0
    %359 = vmatpush1.bf16.msra.mxu0 %v275
    %360 = vmatprep.subr.bf16.mxu0 0
    %361 = vmatpush1.bf16.msra.mxu0 0
    %362 = vmatprep.subr.bf16.mxu0 0
    %363 = vmatpush1.bf16.msra.mxu0 0
    %364 = vmatprep.subr.bf16.mxu0 0
    %365 = vmatpush1.bf16.msra.mxu0 0
    %366 = vmatprep.subr.bf16.mxu0 0
    %367 = vmatpush1.bf16.msra.mxu0 0
    %368 = vmatprep.subr.bf16.mxu0 0
    %369 = vmatpush1.bf16.msra.mxu0 0
    %370 = vmatprep.subr.bf16.mxu0 0
    %371 = vmatpush1.bf16.msra.mxu0 0
    %372 = vmatprep.subr.bf16.mxu0 0
    %373 = vmatpush1.bf16.msra.mxu0 0
    %374 = vmatprep.subr.bf16.mxu0 0
    %375 = vmatpush1.bf16.msra.mxu0 0
    %376 = vmatprep.subr.bf16.mxu0 0
    %377 = vmatpush1.bf16.msra.mxu0 0
    %378 = vmatprep.subr.bf16.mxu0 0
    %379 = vmatpush1.bf16.msra.mxu0 0
    %380 = vmatprep.subr.bf16.mxu0 0
    %381 = vmatpush1.bf16.msra.mxu0 0
    %382 = vmatprep.subr.bf16.mxu0 0
    %383 = vmatpush1.bf16.msra.mxu0 0
    %384 = vmatprep.subr.bf16.mxu0 0
    %385 = vmatpush1.bf16.msra.mxu0 0
    %386 = vmatprep.subr.bf16.mxu0 0
    %387 = vmatpush1.bf16.msra.mxu0 0
    %388 = vmatprep.mubr.bf16.mxu0 0
    %389 = vmatmul.mubr.bf16.gmra.mrb[0].mxu0 %v354
    %v390 = vpop.f32.mrb[0].mxu0
    %v391 = vadd.f32 0.0, %v390
    %v392 = vpop.f32.mrb[0].mxu0
    %v393 = vpop.f32.mrb[0].mxu0
    %v394 = vpop.f32.mrb[0].mxu0
    %395 = vdwg.mxu0
    %v396 = vadd.f32 %v217, %v391
    %v397 = vxor.u32 %v396, 2147483648
    %v398 = vmul.f32 %v397, 1.442695
    %v399 = vpow.pop %v398
    %v400 = vadd.f32 %v399, 1.0
    %v401 = vrcp.pop %v400
    %v402 = vmul.f32 1.0, %v401
    %v403 = vmul.f32 %v402, 2.0
    %v404 = vsub.f32 %v403, 1.0
    %v405 = vsel %vm252, %v404, %v402
    %v406 = vmul.f32 %v405, %v342
    %408 = vrot.lane.b32.xlu0 %v405, 64
    %v409 = vpop.permute.xlu0 %408
    %v411 = vmul.f32 %v405, %v409
    %413 = vrot.lane.b32.xlu0 %v411, 32
    %v414 = vpop.permute.xlu0 %413
    %v416 = vadd.f32 %v406, %v414
    %v417 = vtanh.pop %v416
    %419 = vrot.lane.b32.xlu0 %v417, 64
    %v420 = vpop.permute.xlu0 %419
    %v422 = vmul.f32 %v405, %v420
    %424 = vrot.lane.b32.xlu0 %v348, 32
    %v425 = vpop.permute.xlu0 %424
    %v427 = vsel %vm278, %v425, 0.0
    %v428 = vpack.c.bf16 %v427, %v427
    %v430 = vlaneseq
    %v431 = vshrl.u32 %v430, 7
    %v432 = vsub.s32 0, %v431
    %v433 = vrot.slane %v265, %v432
    %v443 = vunpack.c.l.b16 %v257
    %v444 = vunpack.c.l.b16 %v258
    %v445 = vunpack.c.l.b16 %v259
    %v446 = vunpack.c.l.b16 %v260
    %v447 = vunpack.c.l.b16 %v261
    %v448 = vunpack.c.l.b16 %v262
    %v449 = vunpack.c.l.b16 %v263
    %v450 = vunpack.c.l.b16 %v264
    %v451 = vpack.c.b16 %v444, %v443
    %v452 = vpack.c.b16 %v446, %v445
    %v453 = vpack.c.b16 %v448, %v447
    %v454 = vpack.c.b16 %v450, %v449
    %vm459 = vcmask 523264
    %v461 = vsel %vm459, %v428, 0
    %463 = vmatprep.subr.bf16.mxu0 0
    %464 = vmatpush1.bf16.msra.mxu0 %v451
    %465 = vmatprep.subr.bf16.mxu0 0
    %466 = vmatpush1.bf16.msra.mxu0 %v452
    %467 = vmatprep.subr.bf16.mxu0 0
    %468 = vmatpush1.bf16.msra.mxu0 %v453
    %469 = vmatprep.subr.bf16.mxu0 0
    %470 = vmatpush1.bf16.msra.mxu0 %v454
    %471 = vmatprep.subr.bf16.mxu0 0
    %472 = vmatpush1.bf16.msra.mxu0 0
    %473 = vmatprep.subr.bf16.mxu0 0
    %474 = vmatpush1.bf16.msra.mxu0 0
    %475 = vmatprep.subr.bf16.mxu0 0
    %476 = vmatpush1.bf16.msra.mxu0 0
    %477 = vmatprep.subr.bf16.mxu0 0
    %478 = vmatpush1.bf16.msra.mxu0 0
    %479 = vmatprep.subr.bf16.mxu0 0
    %480 = vmatpush1.bf16.msra.mxu0 0
    %481 = vmatprep.subr.bf16.mxu0 0
    %482 = vmatpush1.bf16.msra.mxu0 0
    %483 = vmatprep.subr.bf16.mxu0 0
    %484 = vmatpush1.bf16.msra.mxu0 0
    %485 = vmatprep.subr.bf16.mxu0 0
    %486 = vmatpush1.bf16.msra.mxu0 0
    %487 = vmatprep.subr.bf16.mxu0 0
    %488 = vmatpush1.bf16.msra.mxu0 0
    %489 = vmatprep.subr.bf16.mxu0 0
    %490 = vmatpush1.bf16.msra.mxu0 0
    %491 = vmatprep.subr.bf16.mxu0 0
    %492 = vmatpush1.bf16.msra.mxu0 0
    %493 = vmatprep.subr.bf16.mxu0 0
    %494 = vmatpush1.bf16.msra.mxu0 0
    %495 = vmatprep.mubr.bf16.mxu0 0
    %496 = vmatmul.mubr.bf16.gmra.mrb[0].mxu0 %v461
    %v497 = vpop.f32.mrb[0].mxu0
    %v498 = vadd.f32 %v433, %v497
    %v499 = vpop.f32.mrb[0].mxu0
    %v500 = vpop.f32.mrb[0].mxu0
    %v501 = vpop.f32.mrb[0].mxu0
    %502 = vdwg.mxu0
    %v503 = vxor.u32 %v498, 2147483648
    %v504 = vmul.f32 %v503, 1.442695
    %v505 = vpow.pop %v504
    %v506 = vadd.f32 %v505, 1.0
    %v507 = vrcp.pop %v506
    %v508 = vmul.f32 1.0, %v507
    %v509 = vmul.f32 %v508, 2.0
    %v510 = vsub.f32 %v509, 1.0
    %v511 = vsel %vm252, %v510, %v508
    %v512 = vmul.f32 %v511, 0.0
    %514 = vrot.lane.b32.xlu0 %v511, 64
    %v515 = vpop.permute.xlu0 %514
    %v517 = vmul.f32 %v511, %v515
    %519 = vrot.lane.b32.xlu0 %v517, 32
    %v520 = vpop.permute.xlu0 %519
    %v522 = vadd.f32 %v512, %v520
    %v523 = vtanh.pop %v522
    %525 = vrot.lane.b32.xlu0 %v523, 64
    %v526 = vpop.permute.xlu0 %525
    %v528 = vmul.f32 %v511, %v526
    %v529 = vpack.c.bf16 %v422, %v422
    %531 = vrot.lane.b32.xlu0 %v529, 32
    %v532 = vpop.permute.xlu0 %531
    %v534 = vsel %vm278, %v532, 0
    %536 = vmatprep.subr.bf16.mxu0 0
    %537 = vmatpush1.bf16.msra.mxu0 %v274
    %538 = vmatprep.subr.bf16.mxu0 0
    %539 = vmatpush1.bf16.msra.mxu0 %v275
    %540 = vmatprep.subr.bf16.mxu0 0
    %541 = vmatpush1.bf16.msra.mxu0 0
    %542 = vmatprep.subr.bf16.mxu0 0
    %543 = vmatpush1.bf16.msra.mxu0 0
    %544 = vmatprep.subr.bf16.mxu0 0
    %545 = vmatpush1.bf16.msra.mxu0 0
    %546 = vmatprep.subr.bf16.mxu0 0
    %547 = vmatpush1.bf16.msra.mxu0 0
    %548 = vmatprep.subr.bf16.mxu0 0
    %549 = vmatpush1.bf16.msra.mxu0 0
    %550 = vmatprep.subr.bf16.mxu0 0
    %551 = vmatpush1.bf16.msra.mxu0 0
    %552 = vmatprep.subr.bf16.mxu0 0
    %553 = vmatpush1.bf16.msra.mxu0 0
    %554 = vmatprep.subr.bf16.mxu0 0
    %555 = vmatpush1.bf16.msra.mxu0 0
    %556 = vmatprep.subr.bf16.mxu0 0
    %557 = vmatpush1.bf16.msra.mxu0 0
    %558 = vmatprep.subr.bf16.mxu0 0
    %559 = vmatpush1.bf16.msra.mxu0 0
    %560 = vmatprep.subr.bf16.mxu0 0
    %561 = vmatpush1.bf16.msra.mxu0 0
    %562 = vmatprep.subr.bf16.mxu0 0
    %563 = vmatpush1.bf16.msra.mxu0 0
    %564 = vmatprep.subr.bf16.mxu0 0
    %565 = vmatpush1.bf16.msra.mxu0 0
    %566 = vmatprep.subr.bf16.mxu0 0
    %567 = vmatpush1.bf16.msra.mxu0 0
    %568 = vmatprep.mubr.bf16.mxu0 0
    %569 = vmatmul.mubr.bf16.gmra.mrb[0].mxu0 %v534
    %v570 = vpop.f32.mrb[0].mxu0
    %v571 = vadd.f32 0.0, %v570
    %v572 = vpop.f32.mrb[0].mxu0
    %v573 = vpop.f32.mrb[0].mxu0
    %v574 = vpop.f32.mrb[0].mxu0
    %575 = vdwg.mxu0
    %v576 = vadd.f32 %v222, %v571
    %v577 = vxor.u32 %v576, 2147483648
    %v578 = vmul.f32 %v577, 1.442695
    %v579 = vpow.pop %v578
    %v580 = vadd.f32 %v579, 1.0
    %v581 = vrcp.pop %v580
    %v582 = vmul.f32 1.0, %v581
    %v583 = vmul.f32 %v582, 2.0
    %v584 = vsub.f32 %v583, 1.0
    %v585 = vsel %vm252, %v584, %v582
    %v586 = vmul.f32 %v585, %v416
    %588 = vrot.lane.b32.xlu0 %v585, 64
    %v589 = vpop.permute.xlu0 %588
    %v591 = vmul.f32 %v585, %v589
    %593 = vrot.lane.b32.xlu0 %v591, 32
    %v594 = vpop.permute.xlu0 %593
    %v596 = vadd.f32 %v586, %v594
    %v597 = vtanh.pop %v596
    %599 = vrot.lane.b32.xlu0 %v597, 64
    %v600 = vpop.permute.xlu0 %599
    %v602 = vmul.f32 %v585, %v600
    %604 = vrot.lane.b32.xlu0 %v422, 32
    %v605 = vpop.permute.xlu0 %604
    %608 = vrot.lane.b32.xlu0 %v528, 64
    %v609 = vpop.permute.xlu0 %608
    %v611 = vsel %vm278, %v605, %v609
    %v612 = vpack.c.bf16 %v611, %v611
    %v614 = vsel %vm459, %v612, 0
    %616 = vmatprep.subr.bf16.mxu0 0
    %617 = vmatpush1.bf16.msra.mxu0 %v451
    %618 = vmatprep.subr.bf16.mxu0 0
    %619 = vmatpush1.bf16.msra.mxu0 %v452
    %620 = vmatprep.subr.bf16.mxu0 0
    %621 = vmatpush1.bf16.msra.mxu0 %v453
    %622 = vmatprep.subr.bf16.mxu0 0
    %623 = vmatpush1.bf16.msra.mxu0 %v454
    %624 = vmatprep.subr.bf16.mxu0 0
    %625 = vmatpush1.bf16.msra.mxu0 0
    %626 = vmatprep.subr.bf16.mxu0 0
    %627 = vmatpush1.bf16.msra.mxu0 0
    %628 = vmatprep.subr.bf16.mxu0 0
    %629 = vmatpush1.bf16.msra.mxu0 0
    %630 = vmatprep.subr.bf16.mxu0 0
    %631 = vmatpush1.bf16.msra.mxu0 0
    %632 = vmatprep.subr.bf16.mxu0 0
    %633 = vmatpush1.bf16.msra.mxu0 0
    %634 = vmatprep.subr.bf16.mxu0 0
    %635 = vmatpush1.bf16.msra.mxu0 0
    %636 = vmatprep.subr.bf16.mxu0 0
    %637 = vmatpush1.bf16.msra.mxu0 0
    %638 = vmatprep.subr.bf16.mxu0 0
    %639 = vmatpush1.bf16.msra.mxu0 0
    %640 = vmatprep.subr.bf16.mxu0 0
    %641 = vmatpush1.bf16.msra.mxu0 0
    %642 = vmatprep.subr.bf16.mxu0 0
    %643 = vmatpush1.bf16.msra.mxu0 0
    %644 = vmatprep.subr.bf16.mxu0 0
    %645 = vmatpush1.bf16.msra.mxu0 0
    %646 = vmatprep.subr.bf16.mxu0 0
    %647 = vmatpush1.bf16.msra.mxu0 0
    %648 = vmatprep.mubr.bf16.mxu0 0
    %649 = vmatmul.mubr.bf16.gmra.mrb[0].mxu0 %v614
    %v650 = vpop.f32.mrb[0].mxu0
    %v651 = vadd.f32 %v433, %v650
    %v652 = vpop.f32.mrb[0].mxu0
    %v653 = vpop.f32.mrb[0].mxu0
    %v654 = vpop.f32.mrb[0].mxu0
    %655 = vdwg.mxu0
    %v656 = vxor.u32 %v651, 2147483648
    %v657 = vmul.f32 %v656, 1.442695
    %v658 = vpow.pop %v657
    %v659 = vadd.f32 %v658, 1.0
    %v660 = vrcp.pop %v659
    %v661 = vmul.f32 1.0, %v660
    %v662 = vmul.f32 %v661, 2.0
    %v663 = vsub.f32 %v662, 1.0
    %v664 = vsel %vm252, %v663, %v661
    %v665 = vmul.f32 %v664, %v522
    %667 = vrot.lane.b32.xlu0 %v664, 64
    %v668 = vpop.permute.xlu0 %667
    %v670 = vmul.f32 %v664, %v668
    %672 = vrot.lane.b32.xlu0 %v670, 32
    %v673 = vpop.permute.xlu0 %672
    %v675 = vadd.f32 %v665, %v673
    %v676 = vtanh.pop %v675
    %678 = vrot.lane.b32.xlu0 %v676, 64
    %v679 = vpop.permute.xlu0 %678
    %v681 = vmul.f32 %v664, %v679
    %v682 = vpack.c.bf16 %v602, %v602
    %684 = vrot.lane.b32.xlu0 %v682, 32
    %v685 = vpop.permute.xlu0 %684
    %v687 = vsel %vm278, %v685, 0
    %689 = vmatprep.subr.bf16.mxu0 0
    %690 = vmatpush1.bf16.msra.mxu0 %v274
    %691 = vmatprep.subr.bf16.mxu0 0
    %692 = vmatpush1.bf16.msra.mxu0 %v275
    %693 = vmatprep.subr.bf16.mxu0 0
    %694 = vmatpush1.bf16.msra.mxu0 0
    %695 = vmatprep.subr.bf16.mxu0 0
    %696 = vmatpush1.bf16.msra.mxu0 0
    %697 = vmatprep.subr.bf16.mxu0 0
    %698 = vmatpush1.bf16.msra.mxu0 0
    %699 = vmatprep.subr.bf16.mxu0 0
    %700 = vmatpush1.bf16.msra.mxu0 0
    %701 = vmatprep.subr.bf16.mxu0 0
    %702 = vmatpush1.bf16.msra.mxu0 0
    %703 = vmatprep.subr.bf16.mxu0 0
    %704 = vmatpush1.bf16.msra.mxu0 0
    %705 = vmatprep.subr.bf16.mxu0 0
    %706 = vmatpush1.bf16.msra.mxu0 0
    %707 = vmatprep.subr.bf16.mxu0 0
    %708 = vmatpush1.bf16.msra.mxu0 0
    %709 = vmatprep.subr.bf16.mxu0 0
    %710 = vmatpush1.bf16.msra.mxu0 0
    %711 = vmatprep.subr.bf16.mxu0 0
    %712 = vmatpush1.bf16.msra.mxu0 0
    %713 = vmatprep.subr.bf16.mxu0 0
    %714 = vmatpush1.bf16.msra.mxu0 0
    %715 = vmatprep.subr.bf16.mxu0 0
    %716 = vmatpush1.bf16.msra.mxu0 0
    %717 = vmatprep.subr.bf16.mxu0 0
    %718 = vmatpush1.bf16.msra.mxu0 0
    %719 = vmatprep.subr.bf16.mxu0 0
    %720 = vmatpush1.bf16.msra.mxu0 0
    %721 = vmatprep.mubr.bf16.mxu0 0
    %722 = vmatmul.mubr.bf16.gmra.mrb[0].mxu0 %v687
    %v723 = vpop.f32.mrb[0].mxu0
    %v724 = vadd.f32 0.0, %v723
    %v725 = vpop.f32.mrb[0].mxu0
    %v726 = vpop.f32.mrb[0].mxu0
    %v727 = vpop.f32.mrb[0].mxu0
    %728 = vdwg.mxu0
    %v729 = vadd.f32 %v227, %v724
    %v730 = vxor.u32 %v729, 2147483648
    %v731 = vmul.f32 %v730, 1.442695
    %v732 = vpow.pop %v731
    %v733 = vadd.f32 %v732, 1.0
    %v734 = vrcp.pop %v733
    %v735 = vmul.f32 1.0, %v734
    %v736 = vmul.f32 %v735, 2.0
    %v737 = vsub.f32 %v736, 1.0
    %v738 = vsel %vm252, %v737, %v735
    %v739 = vmul.f32 %v738, %v596
    %741 = vrot.lane.b32.xlu0 %v738, 64
    %v742 = vpop.permute.xlu0 %741
    %v744 = vmul.f32 %v738, %v742
    %746 = vrot.lane.b32.xlu0 %v744, 32
    %v747 = vpop.permute.xlu0 %746
    %v749 = vadd.f32 %v739, %v747
    %v750 = vtanh.pop %v749
    %752 = vrot.lane.b32.xlu0 %v750, 64
    %v753 = vpop.permute.xlu0 %752
    %v755 = vmul.f32 %v738, %v753
    %757 = vrot.lane.b32.xlu0 %v602, 32
    %v758 = vpop.permute.xlu0 %757
    %761 = vrot.lane.b32.xlu0 %v681, 64
    %v762 = vpop.permute.xlu0 %761
    %v764 = vsel %vm278, %v758, %v762
    %v765 = vpack.c.bf16 %v764, %v764
    %v767 = vsel %vm459, %v765, 0
    %769 = vmatprep.subr.bf16.mxu0 0
    %770 = vmatpush1.bf16.msra.mxu0 %v451
    %771 = vmatprep.subr.bf16.mxu0 0
    %772 = vmatpush1.bf16.msra.mxu0 %v452
    %773 = vmatprep.subr.bf16.mxu0 0
    %774 = vmatpush1.bf16.msra.mxu0 %v453
    %775 = vmatprep.subr.bf16.mxu0 0
    %776 = vmatpush1.bf16.msra.mxu0 %v454
    %777 = vmatprep.subr.bf16.mxu0 0
    %778 = vmatpush1.bf16.msra.mxu0 0
    %779 = vmatprep.subr.bf16.mxu0 0
    %780 = vmatpush1.bf16.msra.mxu0 0
    %781 = vmatprep.subr.bf16.mxu0 0
    %782 = vmatpush1.bf16.msra.mxu0 0
    %783 = vmatprep.subr.bf16.mxu0 0
    %784 = vmatpush1.bf16.msra.mxu0 0
    %785 = vmatprep.subr.bf16.mxu0 0
    %786 = vmatpush1.bf16.msra.mxu0 0
    %787 = vmatprep.subr.bf16.mxu0 0
    %788 = vmatpush1.bf16.msra.mxu0 0
    %789 = vmatprep.subr.bf16.mxu0 0
    %790 = vmatpush1.bf16.msra.mxu0 0
    %791 = vmatprep.subr.bf16.mxu0 0
    %792 = vmatpush1.bf16.msra.mxu0 0
    %793 = vmatprep.subr.bf16.mxu0 0
    %794 = vmatpush1.bf16.msra.mxu0 0
    %795 = vmatprep.subr.bf16.mxu0 0
    %796 = vmatpush1.bf16.msra.mxu0 0
    %797 = vmatprep.subr.bf16.mxu0 0
    %798 = vmatpush1.bf16.msra.mxu0 0
    %799 = vmatprep.subr.bf16.mxu0 0
    %800 = vmatpush1.bf16.msra.mxu0 0
    %801 = vmatprep.mubr.bf16.mxu0 0
    %802 = vmatmul.mubr.bf16.gmra.mrb[0].mxu0 %v767
    %v803 = vpop.f32.mrb[0].mxu0
    %v804 = vadd.f32 %v433, %v803
    %v805 = vpop.f32.mrb[0].mxu0
    %v806 = vpop.f32.mrb[0].mxu0
    %v807 = vpop.f32.mrb[0].mxu0
    %808 = vdwg.mxu0
    %v809 = vxor.u32 %v804, 2147483648
    %v810 = vmul.f32 %v809, 1.442695
    %v811 = vpow.pop %v810
    %v812 = vadd.f32 %v811, 1.0
    %v813 = vrcp.pop %v812
    %v814 = vmul.f32 1.0, %v813
    %v815 = vmul.f32 %v814, 2.0
    %v816 = vsub.f32 %v815, 1.0
    %v817 = vsel %vm252, %v816, %v814
    %v818 = vmul.f32 %v817, %v675
    %820 = vrot.lane.b32.xlu0 %v817, 64
    %v821 = vpop.permute.xlu0 %820
    %v823 = vmul.f32 %v817, %v821
    %825 = vrot.lane.b32.xlu0 %v823, 32
    %v826 = vpop.permute.xlu0 %825
    %v828 = vadd.f32 %v818, %v826
    %v829 = vtanh.pop %v828
    %831 = vrot.lane.b32.xlu0 %v829, 64
    %v832 = vpop.permute.xlu0 %831
    %v834 = vmul.f32 %v817, %v832
    %v835 = vpack.c.bf16 %v755, %v755
    %837 = vrot.lane.b32.xlu0 %v835, 32
    %v838 = vpop.permute.xlu0 %837
    %v840 = vsel %vm278, %v838, 0
    %842 = vmatprep.subr.bf16.mxu0 0
    %843 = vmatpush1.bf16.msra.mxu0 %v274
    %844 = vmatprep.subr.bf16.mxu0 0
    %845 = vmatpush1.bf16.msra.mxu0 %v275
    %846 = vmatprep.subr.bf16.mxu0 0
    %847 = vmatpush1.bf16.msra.mxu0 0
    %848 = vmatprep.subr.bf16.mxu0 0
    %849 = vmatpush1.bf16.msra.mxu0 0
    %850 = vmatprep.subr.bf16.mxu0 0
    %851 = vmatpush1.bf16.msra.mxu0 0
    %852 = vmatprep.subr.bf16.mxu0 0
    %853 = vmatpush1.bf16.msra.mxu0 0
    %854 = vmatprep.subr.bf16.mxu0 0
    %855 = vmatpush1.bf16.msra.mxu0 0
    %856 = vmatprep.subr.bf16.mxu0 0
    %857 = vmatpush1.bf16.msra.mxu0 0
    %858 = vmatprep.subr.bf16.mxu0 0
    %859 = vmatpush1.bf16.msra.mxu0 0
    %860 = vmatprep.subr.bf16.mxu0 0
    %861 = vmatpush1.bf16.msra.mxu0 0
    %862 = vmatprep.subr.bf16.mxu0 0
    %863 = vmatpush1.bf16.msra.mxu0 0
    %864 = vmatprep.subr.bf16.mxu0 0
    %865 = vmatpush1.bf16.msra.mxu0 0
    %866 = vmatprep.subr.bf16.mxu0 0
    %867 = vmatpush1.bf16.msra.mxu0 0
    %868 = vmatprep.subr.bf16.mxu0 0
    %869 = vmatpush1.bf16.msra.mxu0 0
    %870 = vmatprep.subr.bf16.mxu0 0
    %871 = vmatpush1.bf16.msra.mxu0 0
    %872 = vmatprep.subr.bf16.mxu0 0
    %873 = vmatpush1.bf16.msra.mxu0 0
    %874 = vmatprep.mubr.bf16.mxu0 0
    %875 = vmatmul.mubr.bf16.gmra.mrb[0].mxu0 %v840
    %v876 = vpop.f32.mrb[0].mxu0
    %v877 = vadd.f32 0.0, %v876
    %v878 = vpop.f32.mrb[0].mxu0
    %v879 = vpop.f32.mrb[0].mxu0
    %v880 = vpop.f32.mrb[0].mxu0
    %881 = vdwg.mxu0
    %v882 = vadd.f32 %v232, %v877
    %v883 = vxor.u32 %v882, 2147483648
    %v884 = vmul.f32 %v883, 1.442695
    %v885 = vpow.pop %v884
    %v886 = vadd.f32 %v885, 1.0
    %v887 = vrcp.pop %v886
    %v888 = vmul.f32 1.0, %v887
    %v889 = vmul.f32 %v888, 2.0
    %v890 = vsub.f32 %v889, 1.0
    %v891 = vsel %vm252, %v890, %v888
    %v892 = vmul.f32 %v891, %v749
    %894 = vrot.lane.b32.xlu0 %v891, 64
    %v895 = vpop.permute.xlu0 %894
    %v897 = vmul.f32 %v891, %v895
    %899 = vrot.lane.b32.xlu0 %v897, 32
    %v900 = vpop.permute.xlu0 %899
    %v902 = vadd.f32 %v892, %v900
    %v903 = vtanh.pop %v902
    %905 = vrot.lane.b32.xlu0 %v903, 64
    %v906 = vpop.permute.xlu0 %905
    %v908 = vmul.f32 %v891, %v906
    %910 = vrot.lane.b32.xlu0 %v755, 32
    %v911 = vpop.permute.xlu0 %910
    %914 = vrot.lane.b32.xlu0 %v834, 64
    %v915 = vpop.permute.xlu0 %914
    %v917 = vsel %vm278, %v911, %v915
    %v918 = vpack.c.bf16 %v917, %v917
    %v920 = vsel %vm459, %v918, 0
    %922 = vmatprep.subr.bf16.mxu0 0
    %923 = vmatpush1.bf16.msra.mxu0 %v451
    %924 = vmatprep.subr.bf16.mxu0 0
    %925 = vmatpush1.bf16.msra.mxu0 %v452
    %926 = vmatprep.subr.bf16.mxu0 0
    %927 = vmatpush1.bf16.msra.mxu0 %v453
    %928 = vmatprep.subr.bf16.mxu0 0
    %929 = vmatpush1.bf16.msra.mxu0 %v454
    %930 = vmatprep.subr.bf16.mxu0 0
    %931 = vmatpush1.bf16.msra.mxu0 0
    %932 = vmatprep.subr.bf16.mxu0 0
    %933 = vmatpush1.bf16.msra.mxu0 0
    %934 = vmatprep.subr.bf16.mxu0 0
    %935 = vmatpush1.bf16.msra.mxu0 0
    %936 = vmatprep.subr.bf16.mxu0 0
    %937 = vmatpush1.bf16.msra.mxu0 0
    %938 = vmatprep.subr.bf16.mxu0 0
    %939 = vmatpush1.bf16.msra.mxu0 0
    %940 = vmatprep.subr.bf16.mxu0 0
    %941 = vmatpush1.bf16.msra.mxu0 0
    %942 = vmatprep.subr.bf16.mxu0 0
    %943 = vmatpush1.bf16.msra.mxu0 0
    %944 = vmatprep.subr.bf16.mxu0 0
    %945 = vmatpush1.bf16.msra.mxu0 0
    %946 = vmatprep.subr.bf16.mxu0 0
    %947 = vmatpush1.bf16.msra.mxu0 0
    %948 = vmatprep.subr.bf16.mxu0 0
    %949 = vmatpush1.bf16.msra.mxu0 0
    %950 = vmatprep.subr.bf16.mxu0 0
    %951 = vmatpush1.bf16.msra.mxu0 0
    %952 = vmatprep.subr.bf16.mxu0 0
    %953 = vmatpush1.bf16.msra.mxu0 0
    %954 = vmatprep.mubr.bf16.mxu0 0
    %955 = vmatmul.mubr.bf16.gmra.mrb[0].mxu0 %v920
    %v956 = vpop.f32.mrb[0].mxu0
    %v957 = vadd.f32 %v433, %v956
    %v958 = vpop.f32.mrb[0].mxu0
    %v959 = vpop.f32.mrb[0].mxu0
    %v960 = vpop.f32.mrb[0].mxu0
    %961 = vdwg.mxu0
    %v962 = vxor.u32 %v957, 2147483648
    %v963 = vmul.f32 %v962, 1.442695
    %v964 = vpow.pop %v963
    %v965 = vadd.f32 %v964, 1.0
    %v966 = vrcp.pop %v965
    %v967 = vmul.f32 1.0, %v966
    %v968 = vmul.f32 %v967, 2.0
    %v969 = vsub.f32 %v968, 1.0
    %v970 = vsel %vm252, %v969, %v967
    %v971 = vmul.f32 %v970, %v828
    %973 = vrot.lane.b32.xlu0 %v970, 64
    %v974 = vpop.permute.xlu0 %973
    %v976 = vmul.f32 %v970, %v974
    %978 = vrot.lane.b32.xlu0 %v976, 32
    %v979 = vpop.permute.xlu0 %978
    %v981 = vadd.f32 %v971, %v979
    %v982 = vtanh.pop %v981
    %984 = vrot.lane.b32.xlu0 %v982, 64
    %v985 = vpop.permute.xlu0 %984
    %v987 = vmul.f32 %v970, %v985
    %v988 = vpack.c.bf16 %v908, %v908
    %990 = vrot.lane.b32.xlu0 %v988, 32
    %v991 = vpop.permute.xlu0 %990
    %v993 = vsel %vm278, %v991, 0
    %995 = vmatprep.subr.bf16.mxu0 0
    %996 = vmatpush1.bf16.msra.mxu0 %v274
    %997 = vmatprep.subr.bf16.mxu0 0
    %998 = vmatpush1.bf16.msra.mxu0 %v275
    %999 = vmatprep.subr.bf16.mxu0 0
    %1000 = vmatpush1.bf16.msra.mxu0 0
    %1001 = vmatprep.subr.bf16.mxu0 0
    %1002 = vmatpush1.bf16.msra.mxu0 0
    %1003 = vmatprep.subr.bf16.mxu0 0
    %1004 = vmatpush1.bf16.msra.mxu0 0
    %1005 = vmatprep.subr.bf16.mxu0 0
    %1006 = vmatpush1.bf16.msra.mxu0 0
    %1007 = vmatprep.subr.bf16.mxu0 0
    %1008 = vmatpush1.bf16.msra.mxu0 0
    %1009 = vmatprep.subr.bf16.mxu0 0
    %1010 = vmatpush1.bf16.msra.mxu0 0
    %1011 = vmatprep.subr.bf16.mxu0 0
    %1012 = vmatpush1.bf16.msra.mxu0 0
    %1013 = vmatprep.subr.bf16.mxu0 0
    %1014 = vmatpush1.bf16.msra.mxu0 0
    %1015 = vmatprep.subr.bf16.mxu0 0
    %1016 = vmatpush1.bf16.msra.mxu0 0
    %1017 = vmatprep.subr.bf16.mxu0 0
    %1018 = vmatpush1.bf16.msra.mxu0 0
    %1019 = vmatprep.subr.bf16.mxu0 0
    %1020 = vmatpush1.bf16.msra.mxu0 0
    %1021 = vmatprep.subr.bf16.mxu0 0
    %1022 = vmatpush1.bf16.msra.mxu0 0
    %1023 = vmatprep.subr.bf16.mxu0 0
    %1024 = vmatpush1.bf16.msra.mxu0 0
    %1025 = vmatprep.subr.bf16.mxu0 0
    %1026 = vmatpush1.bf16.msra.mxu0 0
    %1027 = vmatprep.mubr.bf16.mxu0 0
    %1028 = vmatmul.mubr.bf16.gmra.mrb[0].mxu0 %v993
    %v1029 = vpop.f32.mrb[0].mxu0
    %v1030 = vadd.f32 0.0, %v1029
    %v1031 = vpop.f32.mrb[0].mxu0
    %v1032 = vpop.f32.mrb[0].mxu0
    %v1033 = vpop.f32.mrb[0].mxu0
    %1034 = vdwg.mxu0
    %v1035 = vadd.f32 %v237, %v1030
    %v1036 = vxor.u32 %v1035, 2147483648
    %v1037 = vmul.f32 %v1036, 1.442695
    %v1038 = vpow.pop %v1037
    %v1039 = vadd.f32 %v1038, 1.0
    %v1040 = vrcp.pop %v1039
    %v1041 = vmul.f32 1.0, %v1040
    %v1042 = vmul.f32 %v1041, 2.0
    %v1043 = vsub.f32 %v1042, 1.0
    %v1044 = vsel %vm252, %v1043, %v1041
    %v1045 = vmul.f32 %v1044, %v902
    %1047 = vrot.lane.b32.xlu0 %v1044, 64
    %v1048 = vpop.permute.xlu0 %1047
    %v1050 = vmul.f32 %v1044, %v1048
    %1052 = vrot.lane.b32.xlu0 %v1050, 32
    %v1053 = vpop.permute.xlu0 %1052
    %v1055 = vadd.f32 %v1045, %v1053
    %v1056 = vtanh.pop %v1055
    %1058 = vrot.lane.b32.xlu0 %v1056, 64
    %v1059 = vpop.permute.xlu0 %1058
    %v1061 = vmul.f32 %v1044, %v1059
    %1063 = vrot.lane.b32.xlu0 %v908, 32
    %v1064 = vpop.permute.xlu0 %1063
    %1067 = vrot.lane.b32.xlu0 %v987, 64
    %v1068 = vpop.permute.xlu0 %1067
    %v1070 = vsel %vm278, %v1064, %v1068
    %v1071 = vpack.c.bf16 %v1070, %v1070
    %v1073 = vsel %vm459, %v1071, 0
    %1075 = vmatprep.subr.bf16.mxu0 0
    %1076 = vmatpush1.bf16.msra.mxu0 %v451
    %1077 = vmatprep.subr.bf16.mxu0 0
    %1078 = vmatpush1.bf16.msra.mxu0 %v452
    %1079 = vmatprep.subr.bf16.mxu0 0
    %1080 = vmatpush1.bf16.msra.mxu0 %v453
    %1081 = vmatprep.subr.bf16.mxu0 0
    %1082 = vmatpush1.bf16.msra.mxu0 %v454
    %1083 = vmatprep.subr.bf16.mxu0 0
    %1084 = vmatpush1.bf16.msra.mxu0 0
    %1085 = vmatprep.subr.bf16.mxu0 0
    %1086 = vmatpush1.bf16.msra.mxu0 0
    %1087 = vmatprep.subr.bf16.mxu0 0
    %1088 = vmatpush1.bf16.msra.mxu0 0
    %1089 = vmatprep.subr.bf16.mxu0 0
    %1090 = vmatpush1.bf16.msra.mxu0 0
    %1091 = vmatprep.subr.bf16.mxu0 0
    %1092 = vmatpush1.bf16.msra.mxu0 0
    %1093 = vmatprep.subr.bf16.mxu0 0
    %1094 = vmatpush1.bf16.msra.mxu0 0
    %1095 = vmatprep.subr.bf16.mxu0 0
    %1096 = vmatpush1.bf16.msra.mxu0 0
    %1097 = vmatprep.subr.bf16.mxu0 0
    %1098 = vmatpush1.bf16.msra.mxu0 0
    %1099 = vmatprep.subr.bf16.mxu0 0
    %1100 = vmatpush1.bf16.msra.mxu0 0
    %1101 = vmatprep.subr.bf16.mxu0 0
    %1102 = vmatpush1.bf16.msra.mxu0 0
    %1103 = vmatprep.subr.bf16.mxu0 0
    %1104 = vmatpush1.bf16.msra.mxu0 0
    %1105 = vmatprep.subr.bf16.mxu0 0
    %1106 = vmatpush1.bf16.msra.mxu0 0
    %1107 = vmatprep.mubr.bf16.mxu0 0
    %1108 = vmatmul.mubr.bf16.gmra.mrb[0].mxu0 %v1073
    %v1109 = vpop.f32.mrb[0].mxu0
    %v1110 = vadd.f32 %v433, %v1109
    %v1111 = vpop.f32.mrb[0].mxu0
    %v1112 = vpop.f32.mrb[0].mxu0
    %v1113 = vpop.f32.mrb[0].mxu0
    %1114 = vdwg.mxu0
    %v1115 = vxor.u32 %v1110, 2147483648
    %v1116 = vmul.f32 %v1115, 1.442695
    %v1117 = vpow.pop %v1116
    %v1118 = vadd.f32 %v1117, 1.0
    %v1119 = vrcp.pop %v1118
    %v1120 = vmul.f32 1.0, %v1119
    %v1121 = vmul.f32 %v1120, 2.0
    %v1122 = vsub.f32 %v1121, 1.0
    %v1123 = vsel %vm252, %v1122, %v1120
    %v1124 = vmul.f32 %v1123, %v981
    %1126 = vrot.lane.b32.xlu0 %v1123, 64
    %v1127 = vpop.permute.xlu0 %1126
    %v1129 = vmul.f32 %v1123, %v1127
    %1131 = vrot.lane.b32.xlu0 %v1129, 32
    %v1132 = vpop.permute.xlu0 %1131
    %v1134 = vadd.f32 %v1124, %v1132
    %v1135 = vtanh.pop %v1134
    %1137 = vrot.lane.b32.xlu0 %v1135, 64
    %v1138 = vpop.permute.xlu0 %1137
    %v1140 = vmul.f32 %v1123, %v1138
    %v1141 = vpack.c.bf16 %v1061, %v1061
    %1143 = vrot.lane.b32.xlu0 %v1141, 32
    %v1144 = vpop.permute.xlu0 %1143
    %v1146 = vsel %vm278, %v1144, 0
    %1148 = vmatprep.subr.bf16.mxu0 0
    %1149 = vmatpush1.bf16.msra.mxu0 %v274
    %1150 = vmatprep.subr.bf16.mxu0 0
    %1151 = vmatpush1.bf16.msra.mxu0 %v275
    %1152 = vmatprep.subr.bf16.mxu0 0
    %1153 = vmatpush1.bf16.msra.mxu0 0
    %1154 = vmatprep.subr.bf16.mxu0 0
    %1155 = vmatpush1.bf16.msra.mxu0 0
    %1156 = vmatprep.subr.bf16.mxu0 0
    %1157 = vmatpush1.bf16.msra.mxu0 0
    %1158 = vmatprep.subr.bf16.mxu0 0
    %1159 = vmatpush1.bf16.msra.mxu0 0
    %1160 = vmatprep.subr.bf16.mxu0 0
    %1161 = vmatpush1.bf16.msra.mxu0 0
    %1162 = vmatprep.subr.bf16.mxu0 0
    %1163 = vmatpush1.bf16.msra.mxu0 0
    %1164 = vmatprep.subr.bf16.mxu0 0
    %1165 = vmatpush1.bf16.msra.mxu0 0
    %1166 = vmatprep.subr.bf16.mxu0 0
    %1167 = vmatpush1.bf16.msra.mxu0 0
    %1168 = vmatprep.subr.bf16.mxu0 0
    %1169 = vmatpush1.bf16.msra.mxu0 0
    %1170 = vmatprep.subr.bf16.mxu0 0
    %1171 = vmatpush1.bf16.msra.mxu0 0
    %1172 = vmatprep.subr.bf16.mxu0 0
    %1173 = vmatpush1.bf16.msra.mxu0 0
    %1174 = vmatprep.subr.bf16.mxu0 0
    %1175 = vmatpush1.bf16.msra.mxu0 0
    %1176 = vmatprep.subr.bf16.mxu0 0
    %1177 = vmatpush1.bf16.msra.mxu0 0
    %1178 = vmatprep.subr.bf16.mxu0 0
    %1179 = vmatpush1.bf16.msra.mxu0 0
    %1180 = vmatprep.mubr.bf16.mxu0 0
    %1181 = vmatmul.mubr.bf16.gmra.mrb[0].mxu0 %v1146
    %v1182 = vpop.f32.mrb[0].mxu0
    %v1183 = vadd.f32 0.0, %v1182
    %v1184 = vpop.f32.mrb[0].mxu0
    %v1185 = vpop.f32.mrb[0].mxu0
    %v1186 = vpop.f32.mrb[0].mxu0
    %1187 = vdwg.mxu0
    %v1188 = vadd.f32 %v242, %v1183
    %v1189 = vxor.u32 %v1188, 2147483648
    %v1190 = vmul.f32 %v1189, 1.442695
    %v1191 = vpow.pop %v1190
    %v1192 = vadd.f32 %v1191, 1.0
    %v1193 = vrcp.pop %v1192
    %v1194 = vmul.f32 1.0, %v1193
    %v1195 = vmul.f32 %v1194, 2.0
    %v1196 = vsub.f32 %v1195, 1.0
    %v1197 = vsel %vm252, %v1196, %v1194
    %v1198 = vmul.f32 %v1197, %v1055
    %1200 = vrot.lane.b32.xlu0 %v1197, 64
    %v1201 = vpop.permute.xlu0 %1200
    %v1203 = vmul.f32 %v1197, %v1201
    %1205 = vrot.lane.b32.xlu0 %v1203, 32
    %v1206 = vpop.permute.xlu0 %1205
    %v1208 = vadd.f32 %v1198, %v1206
    %v1209 = vtanh.pop %v1208
    %1211 = vrot.lane.b32.xlu0 %v1209, 64
    %v1212 = vpop.permute.xlu0 %1211
    %v1214 = vmul.f32 %v1197, %v1212
    %1216 = vrot.lane.b32.xlu0 %v1061, 32
    %v1217 = vpop.permute.xlu0 %1216
    %1220 = vrot.lane.b32.xlu0 %v1140, 64
    %v1221 = vpop.permute.xlu0 %1220
    %v1223 = vsel %vm278, %v1217, %v1221
    %v1224 = vpack.c.bf16 %v1223, %v1223
    %v1226 = vsel %vm459, %v1224, 0
    %1228 = vmatprep.subr.bf16.mxu0 0
    %1229 = vmatpush1.bf16.msra.mxu0 %v451
    %1230 = vmatprep.subr.bf16.mxu0 0
    %1231 = vmatpush1.bf16.msra.mxu0 %v452
    %1232 = vmatprep.subr.bf16.mxu0 0
    %1233 = vmatpush1.bf16.msra.mxu0 %v453
    %1234 = vmatprep.subr.bf16.mxu0 0
    %1235 = vmatpush1.bf16.msra.mxu0 %v454
    %1236 = vmatprep.subr.bf16.mxu0 0
    %1237 = vmatpush1.bf16.msra.mxu0 0
    %1238 = vmatprep.subr.bf16.mxu0 0
    %1239 = vmatpush1.bf16.msra.mxu0 0
    %1240 = vmatprep.subr.bf16.mxu0 0
    %1241 = vmatpush1.bf16.msra.mxu0 0
    %1242 = vmatprep.subr.bf16.mxu0 0
    %1243 = vmatpush1.bf16.msra.mxu0 0
    %1244 = vmatprep.subr.bf16.mxu0 0
    %1245 = vmatpush1.bf16.msra.mxu0 0
    %1246 = vmatprep.subr.bf16.mxu0 0
    %1247 = vmatpush1.bf16.msra.mxu0 0
    %1248 = vmatprep.subr.bf16.mxu0 0
    %1249 = vmatpush1.bf16.msra.mxu0 0
    %1250 = vmatprep.subr.bf16.mxu0 0
    %1251 = vmatpush1.bf16.msra.mxu0 0
    %1252 = vmatprep.subr.bf16.mxu0 0
    %1253 = vmatpush1.bf16.msra.mxu0 0
    %1254 = vmatprep.subr.bf16.mxu0 0
    %1255 = vmatpush1.bf16.msra.mxu0 0
    %1256 = vmatprep.subr.bf16.mxu0 0
    %1257 = vmatpush1.bf16.msra.mxu0 0
    %1258 = vmatprep.subr.bf16.mxu0 0
    %1259 = vmatpush1.bf16.msra.mxu0 0
    %1260 = vmatprep.mubr.bf16.mxu0 0
    %1261 = vmatmul.mubr.bf16.gmra.mrb[0].mxu0 %v1226
    %v1262 = vpop.f32.mrb[0].mxu0
    %v1263 = vadd.f32 %v433, %v1262
    %v1264 = vpop.f32.mrb[0].mxu0
    %v1265 = vpop.f32.mrb[0].mxu0
    %v1266 = vpop.f32.mrb[0].mxu0
    %1267 = vdwg.mxu0
    %v1268 = vxor.u32 %v1263, 2147483648
    %v1269 = vmul.f32 %v1268, 1.442695
    %v1270 = vpow.pop %v1269
    %v1271 = vadd.f32 %v1270, 1.0
    %v1272 = vrcp.pop %v1271
    %v1273 = vmul.f32 1.0, %v1272
    %v1274 = vmul.f32 %v1273, 2.0
    %v1275 = vsub.f32 %v1274, 1.0
    %v1276 = vsel %vm252, %v1275, %v1273
    %v1277 = vmul.f32 %v1276, %v1134
    %1279 = vrot.lane.b32.xlu0 %v1276, 64
    %v1280 = vpop.permute.xlu0 %1279
    %v1282 = vmul.f32 %v1276, %v1280
    %1284 = vrot.lane.b32.xlu0 %v1282, 32
    %v1285 = vpop.permute.xlu0 %1284
    %v1287 = vadd.f32 %v1277, %v1285
    %v1288 = vtanh.pop %v1287
    %1290 = vrot.lane.b32.xlu0 %v1288, 64
    %v1291 = vpop.permute.xlu0 %1290
    %v1293 = vmul.f32 %v1276, %v1291
    %v1294 = vpack.c.bf16 %v1214, %v1214
    %1296 = vrot.lane.b32.xlu0 %v1294, 32
    %v1297 = vpop.permute.xlu0 %1296
    %v1299 = vsel %vm278, %v1297, 0
    %1301 = vmatprep.subr.bf16.mxu0 0
    %1302 = vmatpush1.bf16.msra.mxu0 %v274
    %1303 = vmatprep.subr.bf16.mxu0 0
    %1304 = vmatpush1.bf16.msra.mxu0 %v275
    %1305 = vmatprep.subr.bf16.mxu0 0
    %1306 = vmatpush1.bf16.msra.mxu0 0
    %1307 = vmatprep.subr.bf16.mxu0 0
    %1308 = vmatpush1.bf16.msra.mxu0 0
    %1309 = vmatprep.subr.bf16.mxu0 0
    %1310 = vmatpush1.bf16.msra.mxu0 0
    %1311 = vmatprep.subr.bf16.mxu0 0
    %1312 = vmatpush1.bf16.msra.mxu0 0
    %1313 = vmatprep.subr.bf16.mxu0 0
    %1314 = vmatpush1.bf16.msra.mxu0 0
    %1315 = vmatprep.subr.bf16.mxu0 0
    %1316 = vmatpush1.bf16.msra.mxu0 0
    %1317 = vmatprep.subr.bf16.mxu0 0
    %1318 = vmatpush1.bf16.msra.mxu0 0
    %1319 = vmatprep.subr.bf16.mxu0 0
    %1320 = vmatpush1.bf16.msra.mxu0 0
    %1321 = vmatprep.subr.bf16.mxu0 0
    %1322 = vmatpush1.bf16.msra.mxu0 0
    %1323 = vmatprep.subr.bf16.mxu0 0
    %1324 = vmatpush1.bf16.msra.mxu0 0
    %1325 = vmatprep.subr.bf16.mxu0 0
    %1326 = vmatpush1.bf16.msra.mxu0 0
    %1327 = vmatprep.subr.bf16.mxu0 0
    %1328 = vmatpush1.bf16.msra.mxu0 0
    %1329 = vmatprep.subr.bf16.mxu0 0
    %1330 = vmatpush1.bf16.msra.mxu0 0
    %1331 = vmatprep.subr.bf16.mxu0 0
    %1332 = vmatpush1.bf16.msra.mxu0 0
    %1333 = vmatprep.mubr.bf16.mxu0 0
    %1334 = vmatmul.mubr.bf16.gmra.mrb[0].mxu0 %v1299
    %v1335 = vpop.f32.mrb[0].mxu0
    %v1336 = vadd.f32 0.0, %v1335
    %v1337 = vpop.f32.mrb[0].mxu0
    %v1338 = vpop.f32.mrb[0].mxu0
    %v1339 = vpop.f32.mrb[0].mxu0
    %1340 = vdwg.mxu0
    %v1341 = vadd.f32 %v247, %v1336
    %v1342 = vxor.u32 %v1341, 2147483648
    %v1343 = vmul.f32 %v1342, 1.442695
    %v1344 = vpow.pop %v1343
    %v1345 = vadd.f32 %v1344, 1.0
    %v1346 = vrcp.pop %v1345
    %v1347 = vmul.f32 1.0, %v1346
    %v1348 = vmul.f32 %v1347, 2.0
    %v1349 = vsub.f32 %v1348, 1.0
    %v1350 = vsel %vm252, %v1349, %v1347
    %v1351 = vmul.f32 %v1350, %v1208
    %1353 = vrot.lane.b32.xlu0 %v1350, 64
    %v1354 = vpop.permute.xlu0 %1353
    %v1356 = vmul.f32 %v1350, %v1354
    %1358 = vrot.lane.b32.xlu0 %v1356, 32
    %v1359 = vpop.permute.xlu0 %1358
    %v1361 = vadd.f32 %v1351, %v1359
    %v1362 = vtanh.pop %v1361
    %1364 = vrot.lane.b32.xlu0 %v1362, 64
    %v1365 = vpop.permute.xlu0 %1364
    %v1367 = vmul.f32 %v1350, %v1365
    %1369 = vrot.lane.b32.xlu0 %v1214, 32
    %v1370 = vpop.permute.xlu0 %1369
    %1373 = vrot.lane.b32.xlu0 %v1293, 64
    %v1374 = vpop.permute.xlu0 %1373
    %v1376 = vsel %vm278, %v1370, %v1374
    %v1377 = vpack.c.bf16 %v1376, %v1376
    %v1379 = vsel %vm459, %v1377, 0
    %1381 = vmatprep.subr.bf16.mxu0 0
    %1382 = vmatpush1.bf16.msra.mxu0 %v451
    %1383 = vmatprep.subr.bf16.mxu0 0
    %1384 = vmatpush1.bf16.msra.mxu0 %v452
    %1385 = vmatprep.subr.bf16.mxu0 0
    %1386 = vmatpush1.bf16.msra.mxu0 %v453
    %1387 = vmatprep.subr.bf16.mxu0 0
    %1388 = vmatpush1.bf16.msra.mxu0 %v454
    %1389 = vmatprep.subr.bf16.mxu0 0
    %1390 = vmatpush1.bf16.msra.mxu0 0
    %1391 = vmatprep.subr.bf16.mxu0 0
    %1392 = vmatpush1.bf16.msra.mxu0 0
    %1393 = vmatprep.subr.bf16.mxu0 0
    %1394 = vmatpush1.bf16.msra.mxu0 0
    %1395 = vmatprep.subr.bf16.mxu0 0
    %1396 = vmatpush1.bf16.msra.mxu0 0
    %1397 = vmatprep.subr.bf16.mxu0 0
    %1398 = vmatpush1.bf16.msra.mxu0 0
    %1399 = vmatprep.subr.bf16.mxu0 0
    %1400 = vmatpush1.bf16.msra.mxu0 0
    %1401 = vmatprep.subr.bf16.mxu0 0
    %1402 = vmatpush1.bf16.msra.mxu0 0
    %1403 = vmatprep.subr.bf16.mxu0 0
    %1404 = vmatpush1.bf16.msra.mxu0 0
    %1405 = vmatprep.subr.bf16.mxu0 0
    %1406 = vmatpush1.bf16.msra.mxu0 0
    %1407 = vmatprep.subr.bf16.mxu0 0
    %1408 = vmatpush1.bf16.msra.mxu0 0
    %1409 = vmatprep.subr.bf16.mxu0 0
    %1410 = vmatpush1.bf16.msra.mxu0 0
    %1411 = vmatprep.subr.bf16.mxu0 0
    %1412 = vmatpush1.bf16.msra.mxu0 0
    %1413 = vmatprep.mubr.bf16.mxu0 0
    %1414 = vmatmul.mubr.bf16.gmra.mrb[0].mxu0 %v1379
    %v1415 = vpop.f32.mrb[0].mxu0
    %v1416 = vadd.f32 %v433, %v1415
    %v1417 = vpop.f32.mrb[0].mxu0
    %v1418 = vpop.f32.mrb[0].mxu0
    %v1419 = vpop.f32.mrb[0].mxu0
    %1420 = vdwg.mxu0
    %v1421 = vxor.u32 %v1416, 2147483648
    %v1422 = vmul.f32 %v1421, 1.442695
    %v1423 = vpow.pop %v1422
    %v1424 = vadd.f32 %v1423, 1.0
    %v1425 = vrcp.pop %v1424
    %v1426 = vmul.f32 1.0, %v1425
    %v1427 = vmul.f32 %v1426, 2.0
    %v1428 = vsub.f32 %v1427, 1.0
    %v1429 = vsel %vm252, %v1428, %v1426
    %v1430 = vmul.f32 %v1429, %v1287
    %1432 = vrot.lane.b32.xlu0 %v1429, 64
    %v1433 = vpop.permute.xlu0 %1432
    %v1435 = vmul.f32 %v1429, %v1433
    %1437 = vrot.lane.b32.xlu0 %v1435, 32
    %v1438 = vpop.permute.xlu0 %1437
    %v1440 = vadd.f32 %v1430, %v1438
    %v1441 = vtanh.pop %v1440
    %1443 = vrot.lane.b32.xlu0 %v1441, 64
    %v1444 = vpop.permute.xlu0 %1443
    %v1446 = vmul.f32 %v1429, %v1444
    %1448 = vrot.lane.b32.xlu0 %v1367, 32
    %v1449 = vpop.permute.xlu0 %1448
    %1452 = vrot.lane.b32.xlu0 %v1446, 64
    %v1453 = vpop.permute.xlu0 %1452
    %v1455 = vsel %vm278, %v1449, %v1453
    %v1456 = vpack.c.bf16 %v1455, %v1455
    %v1458 = vsel %vm459, %v1456, 0
    %1460 = vmatprep.subr.bf16.mxu0 0
    %1461 = vmatpush1.bf16.msra.mxu0 %v451
    %1462 = vmatprep.subr.bf16.mxu0 0
    %1463 = vmatpush1.bf16.msra.mxu0 %v452
    %1464 = vmatprep.subr.bf16.mxu0 0
    %1465 = vmatpush1.bf16.msra.mxu0 %v453
    %1466 = vmatprep.subr.bf16.mxu0 0
    %1467 = vmatpush1.bf16.msra.mxu0 %v454
    %1468 = vmatprep.subr.bf16.mxu0 0
    %1469 = vmatpush1.bf16.msra.mxu0 0
    %1470 = vmatprep.subr.bf16.mxu0 0
    %1471 = vmatpush1.bf16.msra.mxu0 0
    %1472 = vmatprep.subr.bf16.mxu0 0
    %1473 = vmatpush1.bf16.msra.mxu0 0
    %1474 = vmatprep.subr.bf16.mxu0 0
    %1475 = vmatpush1.bf16.msra.mxu0 0
    %1476 = vmatprep.subr.bf16.mxu0 0
    %1477 = vmatpush1.bf16.msra.mxu0 0
    %1478 = vmatprep.subr.bf16.mxu0 0
    %1479 = vmatpush1.bf16.msra.mxu0 0
    %1480 = vmatprep.subr.bf16.mxu0 0
    %1481 = vmatpush1.bf16.msra.mxu0 0
    %1482 = vmatprep.subr.bf16.mxu0 0
    %1483 = vmatpush1.bf16.msra.mxu0 0
    %1484 = vmatprep.subr.bf16.mxu0 0
    %1485 = vmatpush1.bf16.msra.mxu0 0
    %1486 = vmatprep.subr.bf16.mxu0 0
    %1487 = vmatpush1.bf16.msra.mxu0 0
    %1488 = vmatprep.subr.bf16.mxu0 0
    %1489 = vmatpush1.bf16.msra.mxu0 0
    %1490 = vmatprep.subr.bf16.mxu0 0
    %1491 = vmatpush1.bf16.msra.mxu0 0
    %1492 = vmatprep.mubr.bf16.mxu0 0
    %1493 = vmatmul.mubr.bf16.gmra.mrb[0].mxu0 %v1458
    %v1494 = vpop.f32.mrb[0].mxu0
    %v1495 = vadd.f32 %v433, %v1494
    %v1496 = vpop.f32.mrb[0].mxu0
    %v1497 = vpop.f32.mrb[0].mxu0
    %v1498 = vpop.f32.mrb[0].mxu0
    %1499 = vdwg.mxu0
    %v1500 = vxor.u32 %v1495, 2147483648
    %v1501 = vmul.f32 %v1500, 1.442695
    %v1502 = vpow.pop %v1501
    %v1503 = vadd.f32 %v1502, 1.0
    %v1504 = vrcp.pop %v1503
    %v1505 = vmul.f32 1.0, %v1504
    %v1506 = vmul.f32 %v1505, 2.0
    %v1507 = vsub.f32 %v1506, 1.0
    %v1508 = vsel %vm252, %v1507, %v1505
    %v1509 = vmul.f32 %v1508, %v1440
    %1511 = vrot.lane.b32.xlu0 %v1508, 64
    %v1512 = vpop.permute.xlu0 %1511
    %v1514 = vmul.f32 %v1508, %v1512
    %1516 = vrot.lane.b32.xlu0 %v1514, 32
    %v1517 = vpop.permute.xlu0 %1516
    %v1519 = vadd.f32 %v1509, %v1517
    %v1520 = vtanh.pop %v1519
    %1522 = vrot.lane.b32.xlu0 %v1520, 64
    %v1523 = vpop.permute.xlu0 %1522
    %v1525 = vmul.f32 %v1508, %v1523
    %v1526 = vld [vmem:[#allocation4] sm:$0xff]
    %v1527 = vld [vmem:[#allocation4 + $0x8] sm:$0xff]
    %v1528 = vld [vmem:[#allocation4 + $0x10] sm:$0xff]
    %v1529 = vld [vmem:[#allocation4 + $0x18] sm:$0xff]
    %v1530 = vld [vmem:[%s6] sm:$0x1]
    %v1532 = vlaneseq
    %v1533 = vshrl.u32 %v1532, 7
    %v1534 = vsub.s32 0, %v1533
    %v1535 = vrot.slane %v1530, %v1534
    %1538 = vrot.lane.b32.xlu0 %v1525, 32
    %v1539 = vpop.permute.xlu0 %1538
    %v1540 = vsel %vm278, %v1539, 0
    %1542 = vmatprep.subr.mxu0 0.0
    %1543 = vmatpush1.msra.mxu0 %v1526
    %1544 = vmatprep.subr.mxu0 0.0
    %1545 = vmatpush1.msra.mxu0 %v1527
    %1546 = vmatprep.subr.mxu0 0.0
    %1547 = vmatpush1.msra.mxu0 %v1528
    %1548 = vmatprep.subr.mxu0 0.0
    %1549 = vmatpush1.msra.mxu0 %v1529
    %1550 = vmatprep.subr.mxu0 0.0
    %1551 = vmatpush1.msra.mxu0 0.0
    %1552 = vmatprep.subr.mxu0 0.0
    %1553 = vmatpush1.msra.mxu0 0.0
    %1554 = vmatprep.subr.mxu0 0.0
    %1555 = vmatpush1.msra.mxu0 0.0
    %1556 = vmatprep.subr.mxu0 0.0
    %1557 = vmatpush1.msra.mxu0 0.0
    %1558 = vmatprep.subr.mxu0 0.0
    %1559 = vmatpush1.msra.mxu0 0.0
    %1560 = vmatprep.subr.mxu0 0.0
    %1561 = vmatpush1.msra.mxu0 0.0
    %1562 = vmatprep.subr.mxu0 0.0
    %1563 = vmatpush1.msra.mxu0 0.0
    %1564 = vmatprep.subr.mxu0 0.0
    %1565 = vmatpush1.msra.mxu0 0.0
    %1566 = vmatprep.subr.mxu0 0.0
    %1567 = vmatpush1.msra.mxu0 0.0
    %1568 = vmatprep.subr.mxu0 0.0
    %1569 = vmatpush1.msra.mxu0 0.0
    %1570 = vmatprep.subr.mxu0 0.0
    %1571 = vmatpush1.msra.mxu0 0.0
    %1572 = vmatprep.subr.mxu0 0.0
    %1573 = vmatpush1.msra.mxu0 0.0
    %1574 = vmatprep.subr.mxu0 0.0
    %1575 = vmatpush1.msra.mxu0 0.0
    %1576 = vmatprep.subr.mxu0 0.0
    %1577 = vmatpush1.msra.mxu0 0.0
    %1578 = vmatprep.subr.mxu0 0.0
    %1579 = vmatpush1.msra.mxu0 0.0
    %1580 = vmatprep.subr.mxu0 0.0
    %1581 = vmatpush1.msra.mxu0 0.0
    %1582 = vmatprep.subr.mxu0 0.0
    %1583 = vmatpush1.msra.mxu0 0.0
    %1584 = vmatprep.subr.mxu0 0.0
    %1585 = vmatpush1.msra.mxu0 0.0
    %1586 = vmatprep.subr.mxu0 0.0
    %1587 = vmatpush1.msra.mxu0 0.0
    %1588 = vmatprep.subr.mxu0 0.0
    %1589 = vmatpush1.msra.mxu0 0.0
    %1590 = vmatprep.subr.mxu0 0.0
    %1591 = vmatpush1.msra.mxu0 0.0
    %1592 = vmatprep.subr.mxu0 0.0
    %1593 = vmatpush1.msra.mxu0 0.0
    %1594 = vmatprep.subr.mxu0 0.0
    %1595 = vmatpush1.msra.mxu0 0.0
    %1596 = vmatprep.subr.mxu0 0.0
    %1597 = vmatpush1.msra.mxu0 0.0
    %1598 = vmatprep.subr.mxu0 0.0
    %1599 = vmatpush1.msra.mxu0 0.0
    %1600 = vmatprep.subr.mxu0 0.0
    %1601 = vmatpush1.msra.mxu0 0.0
    %1602 = vmatprep.subr.mxu0 0.0
    %1603 = vmatpush1.msra.mxu0 0.0
    %1604 = vmatprep.subr.mxu0 0.0
    %1605 = vmatpush1.msra.mxu0 0.0
    %1606 = vmatprep.mubr.f32.mxu0 0.0
    %1607 = vmatmul.mubr.f32.gmra.mrb[0].mxu0 %v1540
    %v1608 = vpop.f32.mrb[0].mxu0
    %v1609 = vadd.f32 %v1535, %v1608
    %v1610 = vpop.f32.mrb[0].mxu0
    %1611 = vdwg.mxu0
    %1612 = vst [vmem:[%s7] sm:$0xff] %v1609
    // Predicated region
    $region38: #{lstm_net_forward.1} parent=1 // pred_check
      _
    $region39: #{lstm_net_forward.1} parent=1 // pred_check_branch
      %1614 = sbr.rel (0) target = $region41
    $region40: #{lstm_net_forward.1} parent=1 // pred_region
      _
    $region41: #{lstm_net_forward.1} parent=1 // pred_fallthru
      _
    // Predicated region
    $region42: #{lstm_net_forward.1} parent=1 // pred_check
      _
    $region43: #{lstm_net_forward.1} parent=1 // pred_check_branch
      %1616 = sbr.rel (0) target = $region45
    $region44: #{lstm_net_forward.1} parent=1 // pred_region
      _
    $region45: #{lstm_net_forward.1} parent=1 // pred_fallthru
      _
    %1617 = vsyncpa [#allocation3], 1
    %1618 = vsyncpa [#allocation5], 1

</llo_original>
